<compile_context>
chip_gen: v6e
topology: v6e:2x2x1
jax: 0.10.0
libtpu: 0.0.40
codegen_flags: <defaults>
</compile_context>

<pallas_src>
import functools

import jax
import jax.numpy as jnp
import numpy as np
from jax import lax
from jax.experimental import pallas as pl
from jax.experimental.pallas import tpu as pltpu


def _round_up(x, m):
    return ((x + m - 1) // m) * m


def seq2seq_kernel(enc_in_ref, x0_ref,
                   w_ih_e_ref, b_ih_e_ref, w_hh_e_ref, b_hh_e_ref,
                   w_ih_d_ref, b_ih_d_ref, w_stk_d_ref, b_stk_d_ref,
                   out_ref, state_ref,
                   *, src_seq_len, target_seq_len, batch_pad, hidden,
                   gate_stride, gate_width, out_width, residual):
    Bp, H, G, GH, OP = batch_pad, hidden, gate_stride, gate_width, out_width

    def gru_step(gx, gh, h):
        # gx / gh already include their biases; gates packed at lane offsets 0, G, 2G.
        r = jax.nn.sigmoid(gx[:, 0:H] + gh[:, 0:H])
        z = jax.nn.sigmoid(gx[:, G:G + H] + gh[:, G:G + H])
        n = jnp.tanh(gx[:, 2 * G:2 * G + H] + r * gh[:, 2 * G:2 * G + H])
        return (1.0 - z) * n + z * h

    # ---- encoder: input projection hoisted out of the recurrence -----------------
    # One lane-dense (T*Bp, D_in) @ (D_in, GH) matmul instead of one per step.
    enc_gx = (jnp.dot(enc_in_ref[...], w_ih_e_ref[...],
                      preferred_element_type=jnp.float32) + b_ih_e_ref[...])

    h = jnp.zeros((Bp, H), jnp.float32)
    for t in range(src_seq_len):                      # fully unrolled (static)
        gh = (jnp.dot(h, w_hh_e_ref[...], preferred_element_type=jnp.float32)
              + b_hh_e_ref[...])
        h = gru_step(enc_gx[t * Bp:(t + 1) * Bp, :], gh, h)

    # ---- decoder: one fused matmul per step -------------------------------------
    # W_stk = [W_hh | W_lin(pad) | W_fold]; res = h @ W_stk + b_stk gives
    #   gh  (this step's hidden gates),
    #   y   = Linear(h)          (finishes the PREVIOUS step's output),
    #   gy  = h @ W_fold + b_fold (next input-gate pre-activation increment),
    # so the recurrence critical path carries exactly one matmul per step.
    x = x0_ref[...]                                   # (Bp, OP), lane-dense
    gx = (jnp.dot(x, w_ih_d_ref[...], preferred_element_type=jnp.float32)
          + b_ih_d_ref[...])

    for i in range(target_seq_len):                   # fully unrolled (static)
        res = (jnp.dot(h, w_stk_d_ref[...], preferred_element_type=jnp.float32)
               + b_stk_d_ref[...])
        gh = res[:, 0:GH]
        if i > 0:
            y = res[:, GH:GH + OP]
            gy = res[:, GH + OP:]
            if residual:
                x = y + x
                gx = gx + gy                          # == x_new @ W_ih_dec + b_ih_dec
            else:
                x = y
                gx = gy + b_ih_d_ref[...]
            out_ref[i - 1] = x                        # lane-dense, unmasked store
        h = gru_step(gx, gh, h)

    state_ref[...] = h

    # Epilogue: the last output uses the final hidden state.
    res = (jnp.dot(h, w_stk_d_ref[...], preferred_element_type=jnp.float32)
           + b_stk_d_ref[...])
    y = res[:, GH:GH + OP]
    x = y + x if residual else y
    out_ref[target_seq_len - 1] = x


def init_params(key, input_size, output_size, hidden):
    """Deterministic synthetic parameters (mirrors the PyTorch module's shapes).

    Per-gate layout, gate order (r, z, n):
      w_ih: (3, D_in, H), w_hh: (3, H, H), b_*: (3, 1, H)
      w_lin: (H, out), b_lin: (1, out)
    """
    ks = jax.random.split(key, 10)
    scale = 1.0 / float(np.sqrt(hidden))

    def u(k, shape, s):
        return jax.random.uniform(k, shape, jnp.float32, -s, s)

    return dict(
        w_ih_enc=u(ks[0], (3, input_size, hidden), scale),
        w_hh_enc=u(ks[1], (3, hidden, hidden), scale),
        b_ih_enc=u(ks[2], (3, 1, hidden), scale),
        b_hh_enc=u(ks[3], (3, 1, hidden), scale),
        w_ih_dec=u(ks[4], (3, output_size, hidden), scale),
        w_hh_dec=u(ks[5], (3, hidden, hidden), scale),
        b_ih_dec=u(ks[6], (3, 1, hidden), scale),
        b_hh_dec=u(ks[7], (3, 1, hidden), scale),
        w_lin=u(ks[8], (hidden, output_size), 0.04),   # DecoderWrapper init range
        b_lin=u(ks[9], (1, output_size), scale),
    )


def seq2seq_forward(params, encoder_input, decoder_input, target_seq_len,
                    residual=True):
    src_seq_len, batch, input_size = encoder_input.shape
    hidden = params["w_hh_enc"].shape[1]
    output_size = params["w_lin"].shape[1]
    assert input_size == output_size       # module asserts this
    T = int(target_seq_len)
    assert T >= 1

    f32 = jnp.float32
    hi = lax.Precision.HIGHEST
    Bp = _round_up(batch, 8)               # sublane-align the batch
    # Gate packing: all three gates share one 128-lane block when they fit,
    # otherwise each gate is padded to a 128-lane multiple.
    G = hidden if 3 * hidden <= 128 else _round_up(hidden, 128)
    GH = _round_up(3 * G, 128)
    OP = _round_up(output_size, 128)       # lane-dense output / residual path
    NW = GH + OP + GH                      # fused decoder RHS width

    # ---- pack the 3 gates along the lane axis (gate g at lanes [g*G, g*G+hidden)) ----
    def pack_cols(w3, rows):               # (3, rows, hidden) -> (rows, GH)
        out = jnp.zeros((rows, GH), f32)
        for g in range(3):
            out = out.at[:, g * G:g * G + hidden].set(w3[g].astype(f32))
        return out

    def pack_bias(b3):                     # (3, 1, hidden) -> (1, GH)
        out = jnp.zeros((1, GH), f32)
        for g in range(3):
            out = out.at[:, g * G:g * G + hidden].set(b3[g].astype(f32))
        return out

    w_ih_e = pack_cols(params["w_ih_enc"], input_size)            # (D_in, GH)
    w_hh_e = pack_cols(params["w_hh_enc"], hidden)                 # (H, GH)
    b_ih_e = pack_bias(params["b_ih_enc"])                         # (1, GH)
    b_hh_e = jnp.broadcast_to(pack_bias(params["b_hh_enc"]), (Bp, GH))

    # decoder input projection: rows padded to OP lanes (rows >= output_size are zero)
    w_ih_d = jnp.zeros((OP, GH), f32).at[:output_size].set(
        pack_cols(params["w_ih_dec"], output_size))                # (OP, GH)
    b_ih_d = jnp.broadcast_to(pack_bias(params["b_ih_dec"]), (Bp, GH))
    w_hh_d = pack_cols(params["w_hh_dec"], hidden)                 # (H, GH)
    b_hh_d = pack_bias(params["b_hh_dec"])                         # (1, GH)

    # lane-dense linear layer
    w_lin_p = jnp.zeros((hidden, OP), f32).at[:, :output_size].set(
        params["w_lin"].astype(f32))
    b_lin_p = jnp.zeros((1, OP), f32).at[:, :output_size].set(
        params["b_lin"].astype(f32))

    # decoder input-projection fold (parameter-only, done once, full precision)
    w_fold = jnp.dot(w_lin_p, w_ih_d, precision=hi, preferred_element_type=f32)
    b_fold = jnp.dot(b_lin_p, w_ih_d, precision=hi, preferred_element_type=f32)

    # fused decoder RHS / bias: one h @ W per step -> [gh | y | gy]
    w_stk_d = jnp.concatenate([w_hh_d, w_lin_p, w_fold], axis=1)   # (H, NW)
    b_stk_d = jnp.broadcast_to(
        jnp.concatenate([b_hh_d, b_lin_p, b_fold], axis=1), (Bp, NW))

    # ---- batch-pad inputs; flatten encoder input for one lane-dense matmul ----
    enc_p = jnp.zeros((src_seq_len, Bp, input_size), f32).at[:, :batch].set(
        encoder_input.astype(f32))
    enc_flat = enc_p.reshape(src_seq_len * Bp, input_size)
    x0 = jnp.zeros((Bp, OP), f32).at[:batch, :output_size].set(
        decoder_input[0].reshape(batch, output_size).astype(f32))

    kernel = functools.partial(
        seq2seq_kernel,
        src_seq_len=src_seq_len,
        target_seq_len=T,
        batch_pad=Bp,
        hidden=hidden,
        gate_stride=G,
        gate_width=GH,
        out_width=OP,
        residual=residual,
    )

    # Advisory cost estimate (latency-bound kernel; keeps XLA's scheduler sane).
    flops = 2 * (src_seq_len * Bp * input_size * GH       # encoder input projection
                 + src_seq_len * Bp * hidden * GH         # encoder recurrence
                 + Bp * OP * GH                           # decoder initial gx
                 + (T + 1) * Bp * hidden * NW)            # fused decoder steps + epilogue
    transcendentals = (src_seq_len + T) * Bp * 3 * hidden
    bytes_accessed = 4 * (enc_flat.size + x0.size + w_ih_e.size + b_ih_e.size
                          + w_hh_e.size + b_hh_e.size + w_ih_d.size + b_ih_d.size
                          + w_stk_d.size + b_stk_d.size
                          + T * Bp * OP + Bp * hidden)

    vmem = pl.BlockSpec(memory_space=pltpu.MemorySpace.VMEM)
    outputs, state = pl.pallas_call(
        kernel,
        out_shape=(
            jax.ShapeDtypeStruct((T, Bp, OP), f32),
            jax.ShapeDtypeStruct((Bp, hidden), f32),
        ),
        in_specs=[vmem] * 10,
        out_specs=(vmem, vmem),
        cost_estimate=pl.CostEstimate(flops=int(flops),
                                      transcendentals=int(transcendentals),
                                      bytes_accessed=int(bytes_accessed)),
        compiler_params=pltpu.CompilerParams(vmem_limit_bytes=32 * 1024 * 1024),
    )(enc_flat, x0,
      w_ih_e, b_ih_e, w_hh_e, b_hh_e,
      w_ih_d, b_ih_d, w_stk_d, b_stk_d)

    # Strip batch / lane padding; PyTorch GRU state has a leading num_layers=1 axis.
    outputs = outputs[:, :batch, :output_size]
    state = state[:batch, :].reshape(1, batch, hidden)
    return outputs, state


# ------------------------- pure-JAX reference (spec-literal) -------------------
def _mm(a, b):
    return jnp.dot(a, b, precision=lax.Precision.HIGHEST,
                   preferred_element_type=jnp.float32)


def _gru_step_ref(x, h, w_ih, w_hh, b_ih, b_hh):
    r = jax.nn.sigmoid(_mm(x, w_ih[0]) + b_ih[0] + _mm(h, w_hh[0]) + b_hh[0])
    z = jax.nn.sigmoid(_mm(x, w_ih[1]) + b_ih[1] + _mm(h, w_hh[1]) + b_hh[1])
    n = jnp.tanh(_mm(x, w_ih[2]) + b_ih[2] + r * (_mm(h, w_hh[2]) + b_hh[2]))
    return (1.0 - z) * n + z * h


def seq2seq_reference(params, encoder_input, decoder_input, target_seq_len,
                      residual=True):
    src_seq_len, batch, _ = encoder_input.shape
    hidden = params["w_hh_enc"].shape[1]
    output_size = params["w_lin"].shape[1]

    h = jnp.zeros((batch, hidden), jnp.float32)
    for t in range(src_seq_len):
        h = _gru_step_ref(encoder_input[t], h,
                          params["w_ih_enc"], params["w_hh_enc"],
                          params["b_ih_enc"], params["b_hh_enc"])

    x = decoder_input[0].reshape(batch, output_size)
    outs = []
    for _ in range(target_seq_len):
        h = _gru_step_ref(x, h,
                          params["w_ih_dec"], params["w_hh_dec"],
                          params["b_ih_dec"], params["b_hh_dec"])
        y = _mm(h, params["w_lin"]) + params["b_lin"]
        x = y + x if residual else y
        outs.append(x)
    return jnp.stack(outs, axis=0), h.reshape(1, batch, hidden)


if __name__ == "__main__":
    key = jax.random.PRNGKey(0)
    pkey, ekey, dkey = jax.random.split(key, 3)

    src_seq_len = 8
    dst_seq_len = 4
    target_seq_len = 5
    batch = 2
    input_size = 16
    output_size = input_size
    hidden = 32  # encoder_hidden_size == decoder_hidden_size

    params = init_params(pkey, input_size, output_size, hidden)
    encoder_input = jax.random.normal(ekey, (src_seq_len, batch, input_size), jnp.float32)
    decoder_input = jax.random.normal(dkey, (dst_seq_len, batch, output_size), jnp.float32)

    fwd = jax.jit(seq2seq_forward, static_argnames=("target_seq_len", "residual"))
    outputs, state = fwd(params, encoder_input, decoder_input,
                         target_seq_len=target_seq_len)
    jax.block_until_ready((outputs, state))

    ref_out, ref_state = seq2seq_reference(params, encoder_input, decoder_input,
                                           target_seq_len)
    assert outputs.shape == (target_seq_len, batch, output_size)
    assert state.shape == (1, batch, hidden)
    assert jnp.allclose(outputs, ref_out, atol=1e-4, rtol=1e-4)
    assert jnp.allclose(state, ref_state, atol=1e-4, rtol=1e-4)
    print("KERNEL_OK")
</pallas_src>

<mosaic_0001>
module attributes {stable_mosaic.version = 11 : i64} {
  func.func @seq2seq_kernel(%arg0: memref<64x16xf32, #tpu.memory_space<vmem>>, %arg1: memref<8x128xf32, #tpu.memory_space<vmem>>, %arg2: memref<16x128xf32, #tpu.memory_space<vmem>>, %arg3: memref<1x128xf32, #tpu.memory_space<vmem>>, %arg4: memref<32x128xf32, #tpu.memory_space<vmem>>, %arg5: memref<8x128xf32, #tpu.memory_space<vmem>>, %arg6: memref<128x128xf32, #tpu.memory_space<vmem>>, %arg7: memref<8x128xf32, #tpu.memory_space<vmem>>, %arg8: memref<32x384xf32, #tpu.memory_space<vmem>>, %arg9: memref<8x384xf32, #tpu.memory_space<vmem>>, %arg10: memref<5x8x128xf32, #tpu.memory_space<vmem>>, %arg11: memref<8x32xf32, #tpu.memory_space<vmem>>) attributes {dimension_semantics = [], scalar_prefetch = 0 : i64, scratch_operands = 0 : i64, tpu.core_type = #tpu.core_type<tc>} {
    %c0 = arith.constant 0 : index
    %c0_0 = arith.constant 0 : index
    %0 = vector.load %arg0[%c0, %c0_0] : memref<64x16xf32, #tpu.memory_space<vmem>>, vector<64x16xf32>
    %c0_1 = arith.constant 0 : index
    %c0_2 = arith.constant 0 : index
    %1 = vector.load %arg2[%c0_1, %c0_2] : memref<16x128xf32, #tpu.memory_space<vmem>>, vector<16x128xf32>
    %cst = arith.constant dense<0.000000e+00> : vector<64x128xf32>
    %2 = tpu.matmul %0, %1, %cst {dimension_numbers = #tpu.dot_dimension_numbers<[1], [0], [0], [1], [0, 0, 1, 1], [], []>} : vector<64x16xf32>, vector<16x128xf32>, vector<64x128xf32> -> vector<64x128xf32>
    %c0_3 = arith.constant 0 : index
    %c0_4 = arith.constant 0 : index
    %3 = vector.load %arg3[%c0_3, %c0_4] : memref<1x128xf32, #tpu.memory_space<vmem>>, vector<1x128xf32>
    %4 = vector.broadcast %3 : vector<1x128xf32> to vector<64x128xf32>
    %5 = arith.addf %2, %4 : vector<64x128xf32>
    %cst_5 = arith.constant 0.000000e+00 : f32
    %6 = vector.broadcast %cst_5 : f32 to vector<8x32xf32>
    %c0_6 = arith.constant 0 : index
    %c0_7 = arith.constant 0 : index
    %7 = vector.load %arg4[%c0_6, %c0_7] : memref<32x128xf32, #tpu.memory_space<vmem>>, vector<32x128xf32>
    %cst_8 = arith.constant dense<0.000000e+00> : vector<8x128xf32>
    %8 = tpu.matmul %6, %7, %cst_8 {dimension_numbers = #tpu.dot_dimension_numbers<[1], [0], [0], [1], [0, 0, 1, 1], [], []>} : vector<8x32xf32>, vector<32x128xf32>, vector<8x128xf32> -> vector<8x128xf32>
    %c0_9 = arith.constant 0 : index
    %c0_10 = arith.constant 0 : index
    %9 = vector.load %arg5[%c0_9, %c0_10] : memref<8x128xf32, #tpu.memory_space<vmem>>, vector<8x128xf32>
    %10 = arith.addf %8, %9 : vector<8x128xf32>
    %11 = vector.extract_strided_slice %5 {offsets = [0, 0], sizes = [8, 128], strides = [1, 1]} : vector<64x128xf32> to vector<8x128xf32>
    %12 = vector.extract_strided_slice %11 {offsets = [0, 0], sizes = [8, 32], strides = [1, 1]} : vector<8x128xf32> to vector<8x32xf32>
    %13 = vector.extract_strided_slice %10 {offsets = [0, 0], sizes = [8, 32], strides = [1, 1]} : vector<8x128xf32> to vector<8x32xf32>
    %14 = arith.addf %12, %13 : vector<8x32xf32>
    %15 = arith.negf %14 : vector<8x32xf32>
    %16 = math.exp %15 : vector<8x32xf32>
    %cst_11 = arith.constant 1.000000e+00 : f32
    %17 = vector.broadcast %cst_11 : f32 to vector<8x32xf32>
    %18 = arith.addf %17, %16 : vector<8x32xf32>
    %19 = arith.divf %17, %18 : vector<8x32xf32>
    %20 = vector.extract_strided_slice %11 {offsets = [0, 32], sizes = [8, 32], strides = [1, 1]} : vector<8x128xf32> to vector<8x32xf32>
    %21 = vector.extract_strided_slice %10 {offsets = [0, 32], sizes = [8, 32], strides = [1, 1]} : vector<8x128xf32> to vector<8x32xf32>
    %22 = arith.addf %20, %21 : vector<8x32xf32>
    %23 = arith.negf %22 : vector<8x32xf32>
    %24 = math.exp %23 : vector<8x32xf32>
    %cst_12 = arith.constant 1.000000e+00 : f32
    %25 = vector.broadcast %cst_12 : f32 to vector<8x32xf32>
    %26 = arith.addf %25, %24 : vector<8x32xf32>
    %27 = arith.divf %25, %26 : vector<8x32xf32>
    %28 = vector.extract_strided_slice %11 {offsets = [0, 64], sizes = [8, 32], strides = [1, 1]} : vector<8x128xf32> to vector<8x32xf32>
    %29 = vector.extract_strided_slice %10 {offsets = [0, 64], sizes = [8, 32], strides = [1, 1]} : vector<8x128xf32> to vector<8x32xf32>
    %30 = arith.mulf %19, %29 : vector<8x32xf32>
    %31 = arith.addf %28, %30 : vector<8x32xf32>
    %32 = math.tanh %31 : vector<8x32xf32>
    %cst_13 = arith.constant 1.000000e+00 : f32
    %33 = vector.broadcast %cst_13 : f32 to vector<8x32xf32>
    %34 = arith.subf %33, %27 : vector<8x32xf32>
    %35 = arith.mulf %34, %32 : vector<8x32xf32>
    %36 = arith.mulf %27, %6 : vector<8x32xf32>
    %37 = arith.addf %35, %36 : vector<8x32xf32>
    %c0_14 = arith.constant 0 : index
    %c0_15 = arith.constant 0 : index
    %38 = vector.load %arg4[%c0_14, %c0_15] : memref<32x128xf32, #tpu.memory_space<vmem>>, vector<32x128xf32>
    %cst_16 = arith.constant dense<0.000000e+00> : vector<8x128xf32>
    %39 = tpu.matmul %37, %38, %cst_16 {dimension_numbers = #tpu.dot_dimension_numbers<[1], [0], [0], [1], [0, 0, 1, 1], [], []>} : vector<8x32xf32>, vector<32x128xf32>, vector<8x128xf32> -> vector<8x128xf32>
    %c0_17 = arith.constant 0 : index
    %c0_18 = arith.constant 0 : index
    %40 = vector.load %arg5[%c0_17, %c0_18] : memref<8x128xf32, #tpu.memory_space<vmem>>, vector<8x128xf32>
    %41 = arith.addf %39, %40 : vector<8x128xf32>
    %42 = vector.extract_strided_slice %5 {offsets = [8, 0], sizes = [8, 128], strides = [1, 1]} : vector<64x128xf32> to vector<8x128xf32>
    %43 = vector.extract_strided_slice %42 {offsets = [0, 0], sizes = [8, 32], strides = [1, 1]} : vector<8x128xf32> to vector<8x32xf32>
    %44 = vector.extract_strided_slice %41 {offsets = [0, 0], sizes = [8, 32], strides = [1, 1]} : vector<8x128xf32> to vector<8x32xf32>
    %45 = arith.addf %43, %44 : vector<8x32xf32>
    %46 = arith.negf %45 : vector<8x32xf32>
    %47 = math.exp %46 : vector<8x32xf32>
    %cst_19 = arith.constant 1.000000e+00 : f32
    %48 = vector.broadcast %cst_19 : f32 to vector<8x32xf32>
    %49 = arith.addf %48, %47 : vector<8x32xf32>
    %50 = arith.divf %48, %49 : vector<8x32xf32>
    %51 = vector.extract_strided_slice %42 {offsets = [0, 32], sizes = [8, 32], strides = [1, 1]} : vector<8x128xf32> to vector<8x32xf32>
    %52 = vector.extract_strided_slice %41 {offsets = [0, 32], sizes = [8, 32], strides = [1, 1]} : vector<8x128xf32> to vector<8x32xf32>
    %53 = arith.addf %51, %52 : vector<8x32xf32>
    %54 = arith.negf %53 : vector<8x32xf32>
    %55 = math.exp %54 : vector<8x32xf32>
    %cst_20 = arith.constant 1.000000e+00 : f32
    %56 = vector.broadcast %cst_20 : f32 to vector<8x32xf32>
    %57 = arith.addf %56, %55 : vector<8x32xf32>
    %58 = arith.divf %56, %57 : vector<8x32xf32>
    %59 = vector.extract_strided_slice %42 {offsets = [0, 64], sizes = [8, 32], strides = [1, 1]} : vector<8x128xf32> to vector<8x32xf32>
    %60 = vector.extract_strided_slice %41 {offsets = [0, 64], sizes = [8, 32], strides = [1, 1]} : vector<8x128xf32> to vector<8x32xf32>
    %61 = arith.mulf %50, %60 : vector<8x32xf32>
    %62 = arith.addf %59, %61 : vector<8x32xf32>
    %63 = math.tanh %62 : vector<8x32xf32>
    %cst_21 = arith.constant 1.000000e+00 : f32
    %64 = vector.broadcast %cst_21 : f32 to vector<8x32xf32>
    %65 = arith.subf %64, %58 : vector<8x32xf32>
    %66 = arith.mulf %65, %63 : vector<8x32xf32>
    %67 = arith.mulf %58, %37 : vector<8x32xf32>
    %68 = arith.addf %66, %67 : vector<8x32xf32>
    %c0_22 = arith.constant 0 : index
    %c0_23 = arith.constant 0 : index
    %69 = vector.load %arg4[%c0_22, %c0_23] : memref<32x128xf32, #tpu.memory_space<vmem>>, vector<32x128xf32>
    %cst_24 = arith.constant dense<0.000000e+00> : vector<8x128xf32>
    %70 = tpu.matmul %68, %69, %cst_24 {dimension_numbers = #tpu.dot_dimension_numbers<[1], [0], [0], [1], [0, 0, 1, 1], [], []>} : vector<8x32xf32>, vector<32x128xf32>, vector<8x128xf32> -> vector<8x128xf32>
    %c0_25 = arith.constant 0 : index
    %c0_26 = arith.constant 0 : index
    %71 = vector.load %arg5[%c0_25, %c0_26] : memref<8x128xf32, #tpu.memory_space<vmem>>, vector<8x128xf32>
    %72 = arith.addf %70, %71 : vector<8x128xf32>
    %73 = vector.extract_strided_slice %5 {offsets = [16, 0], sizes = [8, 128], strides = [1, 1]} : vector<64x128xf32> to vector<8x128xf32>
    %74 = vector.extract_strided_slice %73 {offsets = [0, 0], sizes = [8, 32], strides = [1, 1]} : vector<8x128xf32> to vector<8x32xf32>
    %75 = vector.extract_strided_slice %72 {offsets = [0, 0], sizes = [8, 32], strides = [1, 1]} : vector<8x128xf32> to vector<8x32xf32>
    %76 = arith.addf %74, %75 : vector<8x32xf32>
    %77 = arith.negf %76 : vector<8x32xf32>
    %78 = math.exp %77 : vector<8x32xf32>
    %cst_27 = arith.constant 1.000000e+00 : f32
    %79 = vector.broadcast %cst_27 : f32 to vector<8x32xf32>
    %80 = arith.addf %79, %78 : vector<8x32xf32>
    %81 = arith.divf %79, %80 : vector<8x32xf32>
    %82 = vector.extract_strided_slice %73 {offsets = [0, 32], sizes = [8, 32], strides = [1, 1]} : vector<8x128xf32> to vector<8x32xf32>
    %83 = vector.extract_strided_slice %72 {offsets = [0, 32], sizes = [8, 32], strides = [1, 1]} : vector<8x128xf32> to vector<8x32xf32>
    %84 = arith.addf %82, %83 : vector<8x32xf32>
    %85 = arith.negf %84 : vector<8x32xf32>
    %86 = math.exp %85 : vector<8x32xf32>
    %cst_28 = arith.constant 1.000000e+00 : f32
    %87 = vector.broadcast %cst_28 : f32 to vector<8x32xf32>
    %88 = arith.addf %87, %86 : vector<8x32xf32>
    %89 = arith.divf %87, %88 : vector<8x32xf32>
    %90 = vector.extract_strided_slice %73 {offsets = [0, 64], sizes = [8, 32], strides = [1, 1]} : vector<8x128xf32> to vector<8x32xf32>
    %91 = vector.extract_strided_slice %72 {offsets = [0, 64], sizes = [8, 32], strides = [1, 1]} : vector<8x128xf32> to vector<8x32xf32>
    %92 = arith.mulf %81, %91 : vector<8x32xf32>
    %93 = arith.addf %90, %92 : vector<8x32xf32>
    %94 = math.tanh %93 : vector<8x32xf32>
    %cst_29 = arith.constant 1.000000e+00 : f32
    %95 = vector.broadcast %cst_29 : f32 to vector<8x32xf32>
    %96 = arith.subf %95, %89 : vector<8x32xf32>
    %97 = arith.mulf %96, %94 : vector<8x32xf32>
    %98 = arith.mulf %89, %68 : vector<8x32xf32>
    %99 = arith.addf %97, %98 : vector<8x32xf32>
    %c0_30 = arith.constant 0 : index
    %c0_31 = arith.constant 0 : index
    %100 = vector.load %arg4[%c0_30, %c0_31] : memref<32x128xf32, #tpu.memory_space<vmem>>, vector<32x128xf32>
    %cst_32 = arith.constant dense<0.000000e+00> : vector<8x128xf32>
    %101 = tpu.matmul %99, %100, %cst_32 {dimension_numbers = #tpu.dot_dimension_numbers<[1], [0], [0], [1], [0, 0, 1, 1], [], []>} : vector<8x32xf32>, vector<32x128xf32>, vector<8x128xf32> -> vector<8x128xf32>
    %c0_33 = arith.constant 0 : index
    %c0_34 = arith.constant 0 : index
    %102 = vector.load %arg5[%c0_33, %c0_34] : memref<8x128xf32, #tpu.memory_space<vmem>>, vector<8x128xf32>
    %103 = arith.addf %101, %102 : vector<8x128xf32>
    %104 = vector.extract_strided_slice %5 {offsets = [24, 0], sizes = [8, 128], strides = [1, 1]} : vector<64x128xf32> to vector<8x128xf32>
    %105 = vector.extract_strided_slice %104 {offsets = [0, 0], sizes = [8, 32], strides = [1, 1]} : vector<8x128xf32> to vector<8x32xf32>
    %106 = vector.extract_strided_slice %103 {offsets = [0, 0], sizes = [8, 32], strides = [1, 1]} : vector<8x128xf32> to vector<8x32xf32>
    %107 = arith.addf %105, %106 : vector<8x32xf32>
    %108 = arith.negf %107 : vector<8x32xf32>
    %109 = math.exp %108 : vector<8x32xf32>
    %cst_35 = arith.constant 1.000000e+00 : f32
    %110 = vector.broadcast %cst_35 : f32 to vector<8x32xf32>
    %111 = arith.addf %110, %109 : vector<8x32xf32>
    %112 = arith.divf %110, %111 : vector<8x32xf32>
    %113 = vector.extract_strided_slice %104 {offsets = [0, 32], sizes = [8, 32], strides = [1, 1]} : vector<8x128xf32> to vector<8x32xf32>
    %114 = vector.extract_strided_slice %103 {offsets = [0, 32], sizes = [8, 32], strides = [1, 1]} : vector<8x128xf32> to vector<8x32xf32>
    %115 = arith.addf %113, %114 : vector<8x32xf32>
    %116 = arith.negf %115 : vector<8x32xf32>
    %117 = math.exp %116 : vector<8x32xf32>
    %cst_36 = arith.constant 1.000000e+00 : f32
    %118 = vector.broadcast %cst_36 : f32 to vector<8x32xf32>
    %119 = arith.addf %118, %117 : vector<8x32xf32>
    %120 = arith.divf %118, %119 : vector<8x32xf32>
    %121 = vector.extract_strided_slice %104 {offsets = [0, 64], sizes = [8, 32], strides = [1, 1]} : vector<8x128xf32> to vector<8x32xf32>
    %122 = vector.extract_strided_slice %103 {offsets = [0, 64], sizes = [8, 32], strides = [1, 1]} : vector<8x128xf32> to vector<8x32xf32>
    %123 = arith.mulf %112, %122 : vector<8x32xf32>
    %124 = arith.addf %121, %123 : vector<8x32xf32>
    %125 = math.tanh %124 : vector<8x32xf32>
    %cst_37 = arith.constant 1.000000e+00 : f32
    %126 = vector.broadcast %cst_37 : f32 to vector<8x32xf32>
    %127 = arith.subf %126, %120 : vector<8x32xf32>
    %128 = arith.mulf %127, %125 : vector<8x32xf32>
    %129 = arith.mulf %120, %99 : vector<8x32xf32>
    %130 = arith.addf %128, %129 : vector<8x32xf32>
    %c0_38 = arith.constant 0 : index
    %c0_39 = arith.constant 0 : index
    %131 = vector.load %arg4[%c0_38, %c0_39] : memref<32x128xf32, #tpu.memory_space<vmem>>, vector<32x128xf32>
    %cst_40 = arith.constant dense<0.000000e+00> : vector<8x128xf32>
    %132 = tpu.matmul %130, %131, %cst_40 {dimension_numbers = #tpu.dot_dimension_numbers<[1], [0], [0], [1], [0, 0, 1, 1], [], []>} : vector<8x32xf32>, vector<32x128xf32>, vector<8x128xf32> -> vector<8x128xf32>
    %c0_41 = arith.constant 0 : index
    %c0_42 = arith.constant 0 : index
    %133 = vector.load %arg5[%c0_41, %c0_42] : memref<8x128xf32, #tpu.memory_space<vmem>>, vector<8x128xf32>
    %134 = arith.addf %132, %133 : vector<8x128xf32>
    %135 = vector.extract_strided_slice %5 {offsets = [32, 0], sizes = [8, 128], strides = [1, 1]} : vector<64x128xf32> to vector<8x128xf32>
    %136 = vector.extract_strided_slice %135 {offsets = [0, 0], sizes = [8, 32], strides = [1, 1]} : vector<8x128xf32> to vector<8x32xf32>
    %137 = vector.extract_strided_slice %134 {offsets = [0, 0], sizes = [8, 32], strides = [1, 1]} : vector<8x128xf32> to vector<8x32xf32>
    %138 = arith.addf %136, %137 : vector<8x32xf32>
    %139 = arith.negf %138 : vector<8x32xf32>
    %140 = math.exp %139 : vector<8x32xf32>
    %cst_43 = arith.constant 1.000000e+00 : f32
    %141 = vector.broadcast %cst_43 : f32 to vector<8x32xf32>
    %142 = arith.addf %141, %140 : vector<8x32xf32>
    %143 = arith.divf %141, %142 : vector<8x32xf32>
    %144 = vector.extract_strided_slice %135 {offsets = [0, 32], sizes = [8, 32], strides = [1, 1]} : vector<8x128xf32> to vector<8x32xf32>
    %145 = vector.extract_strided_slice %134 {offsets = [0, 32], sizes = [8, 32], strides = [1, 1]} : vector<8x128xf32> to vector<8x32xf32>
    %146 = arith.addf %144, %145 : vector<8x32xf32>
    %147 = arith.negf %146 : vector<8x32xf32>
    %148 = math.exp %147 : vector<8x32xf32>
    %cst_44 = arith.constant 1.000000e+00 : f32
    %149 = vector.broadcast %cst_44 : f32 to vector<8x32xf32>
    %150 = arith.addf %149, %148 : vector<8x32xf32>
    %151 = arith.divf %149, %150 : vector<8x32xf32>
    %152 = vector.extract_strided_slice %135 {offsets = [0, 64], sizes = [8, 32], strides = [1, 1]} : vector<8x128xf32> to vector<8x32xf32>
    %153 = vector.extract_strided_slice %134 {offsets = [0, 64], sizes = [8, 32], strides = [1, 1]} : vector<8x128xf32> to vector<8x32xf32>
    %154 = arith.mulf %143, %153 : vector<8x32xf32>
    %155 = arith.addf %152, %154 : vector<8x32xf32>
    %156 = math.tanh %155 : vector<8x32xf32>
    %cst_45 = arith.constant 1.000000e+00 : f32
    %157 = vector.broadcast %cst_45 : f32 to vector<8x32xf32>
    %158 = arith.subf %157, %151 : vector<8x32xf32>
    %159 = arith.mulf %158, %156 : vector<8x32xf32>
    %160 = arith.mulf %151, %130 : vector<8x32xf32>
    %161 = arith.addf %159, %160 : vector<8x32xf32>
    %c0_46 = arith.constant 0 : index
    %c0_47 = arith.constant 0 : index
    %162 = vector.load %arg4[%c0_46, %c0_47] : memref<32x128xf32, #tpu.memory_space<vmem>>, vector<32x128xf32>
    %cst_48 = arith.constant dense<0.000000e+00> : vector<8x128xf32>
    %163 = tpu.matmul %161, %162, %cst_48 {dimension_numbers = #tpu.dot_dimension_numbers<[1], [0], [0], [1], [0, 0, 1, 1], [], []>} : vector<8x32xf32>, vector<32x128xf32>, vector<8x128xf32> -> vector<8x128xf32>
    %c0_49 = arith.constant 0 : index
    %c0_50 = arith.constant 0 : index
    %164 = vector.load %arg5[%c0_49, %c0_50] : memref<8x128xf32, #tpu.memory_space<vmem>>, vector<8x128xf32>
    %165 = arith.addf %163, %164 : vector<8x128xf32>
    %166 = vector.extract_strided_slice %5 {offsets = [40, 0], sizes = [8, 128], strides = [1, 1]} : vector<64x128xf32> to vector<8x128xf32>
    %167 = vector.extract_strided_slice %166 {offsets = [0, 0], sizes = [8, 32], strides = [1, 1]} : vector<8x128xf32> to vector<8x32xf32>
    %168 = vector.extract_strided_slice %165 {offsets = [0, 0], sizes = [8, 32], strides = [1, 1]} : vector<8x128xf32> to vector<8x32xf32>
    %169 = arith.addf %167, %168 : vector<8x32xf32>
    %170 = arith.negf %169 : vector<8x32xf32>
    %171 = math.exp %170 : vector<8x32xf32>
    %cst_51 = arith.constant 1.000000e+00 : f32
    %172 = vector.broadcast %cst_51 : f32 to vector<8x32xf32>
    %173 = arith.addf %172, %171 : vector<8x32xf32>
    %174 = arith.divf %172, %173 : vector<8x32xf32>
    %175 = vector.extract_strided_slice %166 {offsets = [0, 32], sizes = [8, 32], strides = [1, 1]} : vector<8x128xf32> to vector<8x32xf32>
    %176 = vector.extract_strided_slice %165 {offsets = [0, 32], sizes = [8, 32], strides = [1, 1]} : vector<8x128xf32> to vector<8x32xf32>
    %177 = arith.addf %175, %176 : vector<8x32xf32>
    %178 = arith.negf %177 : vector<8x32xf32>
    %179 = math.exp %178 : vector<8x32xf32>
    %cst_52 = arith.constant 1.000000e+00 : f32
    %180 = vector.broadcast %cst_52 : f32 to vector<8x32xf32>
    %181 = arith.addf %180, %179 : vector<8x32xf32>
    %182 = arith.divf %180, %181 : vector<8x32xf32>
    %183 = vector.extract_strided_slice %166 {offsets = [0, 64], sizes = [8, 32], strides = [1, 1]} : vector<8x128xf32> to vector<8x32xf32>
    %184 = vector.extract_strided_slice %165 {offsets = [0, 64], sizes = [8, 32], strides = [1, 1]} : vector<8x128xf32> to vector<8x32xf32>
    %185 = arith.mulf %174, %184 : vector<8x32xf32>
    %186 = arith.addf %183, %185 : vector<8x32xf32>
    %187 = math.tanh %186 : vector<8x32xf32>
    %cst_53 = arith.constant 1.000000e+00 : f32
    %188 = vector.broadcast %cst_53 : f32 to vector<8x32xf32>
    %189 = arith.subf %188, %182 : vector<8x32xf32>
    %190 = arith.mulf %189, %187 : vector<8x32xf32>
    %191 = arith.mulf %182, %161 : vector<8x32xf32>
    %192 = arith.addf %190, %191 : vector<8x32xf32>
    %c0_54 = arith.constant 0 : index
    %c0_55 = arith.constant 0 : index
    %193 = vector.load %arg4[%c0_54, %c0_55] : memref<32x128xf32, #tpu.memory_space<vmem>>, vector<32x128xf32>
    %cst_56 = arith.constant dense<0.000000e+00> : vector<8x128xf32>
    %194 = tpu.matmul %192, %193, %cst_56 {dimension_numbers = #tpu.dot_dimension_numbers<[1], [0], [0], [1], [0, 0, 1, 1], [], []>} : vector<8x32xf32>, vector<32x128xf32>, vector<8x128xf32> -> vector<8x128xf32>
    %c0_57 = arith.constant 0 : index
    %c0_58 = arith.constant 0 : index
    %195 = vector.load %arg5[%c0_57, %c0_58] : memref<8x128xf32, #tpu.memory_space<vmem>>, vector<8x128xf32>
    %196 = arith.addf %194, %195 : vector<8x128xf32>
    %197 = vector.extract_strided_slice %5 {offsets = [48, 0], sizes = [8, 128], strides = [1, 1]} : vector<64x128xf32> to vector<8x128xf32>
    %198 = vector.extract_strided_slice %197 {offsets = [0, 0], sizes = [8, 32], strides = [1, 1]} : vector<8x128xf32> to vector<8x32xf32>
    %199 = vector.extract_strided_slice %196 {offsets = [0, 0], sizes = [8, 32], strides = [1, 1]} : vector<8x128xf32> to vector<8x32xf32>
    %200 = arith.addf %198, %199 : vector<8x32xf32>
    %201 = arith.negf %200 : vector<8x32xf32>
    %202 = math.exp %201 : vector<8x32xf32>
    %cst_59 = arith.constant 1.000000e+00 : f32
    %203 = vector.broadcast %cst_59 : f32 to vector<8x32xf32>
    %204 = arith.addf %203, %202 : vector<8x32xf32>
    %205 = arith.divf %203, %204 : vector<8x32xf32>
    %206 = vector.extract_strided_slice %197 {offsets = [0, 32], sizes = [8, 32], strides = [1, 1]} : vector<8x128xf32> to vector<8x32xf32>
    %207 = vector.extract_strided_slice %196 {offsets = [0, 32], sizes = [8, 32], strides = [1, 1]} : vector<8x128xf32> to vector<8x32xf32>
    %208 = arith.addf %206, %207 : vector<8x32xf32>
    %209 = arith.negf %208 : vector<8x32xf32>
    %210 = math.exp %209 : vector<8x32xf32>
    %cst_60 = arith.constant 1.000000e+00 : f32
    %211 = vector.broadcast %cst_60 : f32 to vector<8x32xf32>
    %212 = arith.addf %211, %210 : vector<8x32xf32>
    %213 = arith.divf %211, %212 : vector<8x32xf32>
    %214 = vector.extract_strided_slice %197 {offsets = [0, 64], sizes = [8, 32], strides = [1, 1]} : vector<8x128xf32> to vector<8x32xf32>
    %215 = vector.extract_strided_slice %196 {offsets = [0, 64], sizes = [8, 32], strides = [1, 1]} : vector<8x128xf32> to vector<8x32xf32>
    %216 = arith.mulf %205, %215 : vector<8x32xf32>
    %217 = arith.addf %214, %216 : vector<8x32xf32>
    %218 = math.tanh %217 : vector<8x32xf32>
    %cst_61 = arith.constant 1.000000e+00 : f32
    %219 = vector.broadcast %cst_61 : f32 to vector<8x32xf32>
    %220 = arith.subf %219, %213 : vector<8x32xf32>
    %221 = arith.mulf %220, %218 : vector<8x32xf32>
    %222 = arith.mulf %213, %192 : vector<8x32xf32>
    %223 = arith.addf %221, %222 : vector<8x32xf32>
    %c0_62 = arith.constant 0 : index
    %c0_63 = arith.constant 0 : index
    %224 = vector.load %arg4[%c0_62, %c0_63] : memref<32x128xf32, #tpu.memory_space<vmem>>, vector<32x128xf32>
    %cst_64 = arith.constant dense<0.000000e+00> : vector<8x128xf32>
    %225 = tpu.matmul %223, %224, %cst_64 {dimension_numbers = #tpu.dot_dimension_numbers<[1], [0], [0], [1], [0, 0, 1, 1], [], []>} : vector<8x32xf32>, vector<32x128xf32>, vector<8x128xf32> -> vector<8x128xf32>
    %c0_65 = arith.constant 0 : index
    %c0_66 = arith.constant 0 : index
    %226 = vector.load %arg5[%c0_65, %c0_66] : memref<8x128xf32, #tpu.memory_space<vmem>>, vector<8x128xf32>
    %227 = arith.addf %225, %226 : vector<8x128xf32>
    %228 = vector.extract_strided_slice %5 {offsets = [56, 0], sizes = [8, 128], strides = [1, 1]} : vector<64x128xf32> to vector<8x128xf32>
    %229 = vector.extract_strided_slice %228 {offsets = [0, 0], sizes = [8, 32], strides = [1, 1]} : vector<8x128xf32> to vector<8x32xf32>
    %230 = vector.extract_strided_slice %227 {offsets = [0, 0], sizes = [8, 32], strides = [1, 1]} : vector<8x128xf32> to vector<8x32xf32>
    %231 = arith.addf %229, %230 : vector<8x32xf32>
    %232 = arith.negf %231 : vector<8x32xf32>
    %233 = math.exp %232 : vector<8x32xf32>
    %cst_67 = arith.constant 1.000000e+00 : f32
    %234 = vector.broadcast %cst_67 : f32 to vector<8x32xf32>
    %235 = arith.addf %234, %233 : vector<8x32xf32>
    %236 = arith.divf %234, %235 : vector<8x32xf32>
    %237 = vector.extract_strided_slice %228 {offsets = [0, 32], sizes = [8, 32], strides = [1, 1]} : vector<8x128xf32> to vector<8x32xf32>
    %238 = vector.extract_strided_slice %227 {offsets = [0, 32], sizes = [8, 32], strides = [1, 1]} : vector<8x128xf32> to vector<8x32xf32>
    %239 = arith.addf %237, %238 : vector<8x32xf32>
    %240 = arith.negf %239 : vector<8x32xf32>
    %241 = math.exp %240 : vector<8x32xf32>
    %cst_68 = arith.constant 1.000000e+00 : f32
    %242 = vector.broadcast %cst_68 : f32 to vector<8x32xf32>
    %243 = arith.addf %242, %241 : vector<8x32xf32>
    %244 = arith.divf %242, %243 : vector<8x32xf32>
    %245 = vector.extract_strided_slice %228 {offsets = [0, 64], sizes = [8, 32], strides = [1, 1]} : vector<8x128xf32> to vector<8x32xf32>
    %246 = vector.extract_strided_slice %227 {offsets = [0, 64], sizes = [8, 32], strides = [1, 1]} : vector<8x128xf32> to vector<8x32xf32>
    %247 = arith.mulf %236, %246 : vector<8x32xf32>
    %248 = arith.addf %245, %247 : vector<8x32xf32>
    %249 = math.tanh %248 : vector<8x32xf32>
    %cst_69 = arith.constant 1.000000e+00 : f32
    %250 = vector.broadcast %cst_69 : f32 to vector<8x32xf32>
    %251 = arith.subf %250, %244 : vector<8x32xf32>
    %252 = arith.mulf %251, %249 : vector<8x32xf32>
    %253 = arith.mulf %244, %223 : vector<8x32xf32>
    %254 = arith.addf %252, %253 : vector<8x32xf32>
    %c0_70 = arith.constant 0 : index
    %c0_71 = arith.constant 0 : index
    %255 = vector.load %arg1[%c0_70, %c0_71] : memref<8x128xf32, #tpu.memory_space<vmem>>, vector<8x128xf32>
    %c0_72 = arith.constant 0 : index
    %c0_73 = arith.constant 0 : index
    %256 = vector.load %arg6[%c0_72, %c0_73] : memref<128x128xf32, #tpu.memory_space<vmem>>, vector<128x128xf32>
    %cst_74 = arith.constant dense<0.000000e+00> : vector<8x128xf32>
    %257 = tpu.matmul %255, %256, %cst_74 {dimension_numbers = #tpu.dot_dimension_numbers<[1], [0], [0], [1], [0, 0, 1, 1], [], []>} : vector<8x128xf32>, vector<128x128xf32>, vector<8x128xf32> -> vector<8x128xf32>
    %c0_75 = arith.constant 0 : index
    %c0_76 = arith.constant 0 : index
    %258 = vector.load %arg7[%c0_75, %c0_76] : memref<8x128xf32, #tpu.memory_space<vmem>>, vector<8x128xf32>
    %259 = arith.addf %257, %258 : vector<8x128xf32>
    %c0_77 = arith.constant 0 : index
    %c0_78 = arith.constant 0 : index
    %260 = vector.load %arg8[%c0_77, %c0_78] : memref<32x384xf32, #tpu.memory_space<vmem>>, vector<32x384xf32>
    %cst_79 = arith.constant dense<0.000000e+00> : vector<8x384xf32>
    %261 = tpu.matmul %254, %260, %cst_79 {dimension_numbers = #tpu.dot_dimension_numbers<[1], [0], [0], [1], [0, 0, 1, 1], [], []>} : vector<8x32xf32>, vector<32x384xf32>, vector<8x384xf32> -> vector<8x384xf32>
    %c0_80 = arith.constant 0 : index
    %c0_81 = arith.constant 0 : index
    %262 = vector.load %arg9[%c0_80, %c0_81] : memref<8x384xf32, #tpu.memory_space<vmem>>, vector<8x384xf32>
    %263 = arith.addf %261, %262 : vector<8x384xf32>
    %264 = vector.extract_strided_slice %263 {offsets = [0, 0], sizes = [8, 128], strides = [1, 1]} : vector<8x384xf32> to vector<8x128xf32>
    %265 = vector.extract_strided_slice %259 {offsets = [0, 0], sizes = [8, 32], strides = [1, 1]} : vector<8x128xf32> to vector<8x32xf32>
    %266 = vector.extract_strided_slice %264 {offsets = [0, 0], sizes = [8, 32], strides = [1, 1]} : vector<8x128xf32> to vector<8x32xf32>
    %267 = arith.addf %265, %266 : vector<8x32xf32>
    %268 = arith.negf %267 : vector<8x32xf32>
    %269 = math.exp %268 : vector<8x32xf32>
    %cst_82 = arith.constant 1.000000e+00 : f32
    %270 = vector.broadcast %cst_82 : f32 to vector<8x32xf32>
    %271 = arith.addf %270, %269 : vector<8x32xf32>
    %272 = arith.divf %270, %271 : vector<8x32xf32>
    %273 = vector.extract_strided_slice %259 {offsets = [0, 32], sizes = [8, 32], strides = [1, 1]} : vector<8x128xf32> to vector<8x32xf32>
    %274 = vector.extract_strided_slice %264 {offsets = [0, 32], sizes = [8, 32], strides = [1, 1]} : vector<8x128xf32> to vector<8x32xf32>
    %275 = arith.addf %273, %274 : vector<8x32xf32>
    %276 = arith.negf %275 : vector<8x32xf32>
    %277 = math.exp %276 : vector<8x32xf32>
    %cst_83 = arith.constant 1.000000e+00 : f32
    %278 = vector.broadcast %cst_83 : f32 to vector<8x32xf32>
    %279 = arith.addf %278, %277 : vector<8x32xf32>
    %280 = arith.divf %278, %279 : vector<8x32xf32>
    %281 = vector.extract_strided_slice %259 {offsets = [0, 64], sizes = [8, 32], strides = [1, 1]} : vector<8x128xf32> to vector<8x32xf32>
    %282 = vector.extract_strided_slice %264 {offsets = [0, 64], sizes = [8, 32], strides = [1, 1]} : vector<8x128xf32> to vector<8x32xf32>
    %283 = arith.mulf %272, %282 : vector<8x32xf32>
    %284 = arith.addf %281, %283 : vector<8x32xf32>
    %285 = math.tanh %284 : vector<8x32xf32>
    %cst_84 = arith.constant 1.000000e+00 : f32
    %286 = vector.broadcast %cst_84 : f32 to vector<8x32xf32>
    %287 = arith.subf %286, %280 : vector<8x32xf32>
    %288 = arith.mulf %287, %285 : vector<8x32xf32>
    %289 = arith.mulf %280, %254 : vector<8x32xf32>
    %290 = arith.addf %288, %289 : vector<8x32xf32>
    %c0_85 = arith.constant 0 : index
    %c0_86 = arith.constant 0 : index
    %291 = vector.load %arg8[%c0_85, %c0_86] : memref<32x384xf32, #tpu.memory_space<vmem>>, vector<32x384xf32>
    %cst_87 = arith.constant dense<0.000000e+00> : vector<8x384xf32>
    %292 = tpu.matmul %290, %291, %cst_87 {dimension_numbers = #tpu.dot_dimension_numbers<[1], [0], [0], [1], [0, 0, 1, 1], [], []>} : vector<8x32xf32>, vector<32x384xf32>, vector<8x384xf32> -> vector<8x384xf32>
    %c0_88 = arith.constant 0 : index
    %c0_89 = arith.constant 0 : index
    %293 = vector.load %arg9[%c0_88, %c0_89] : memref<8x384xf32, #tpu.memory_space<vmem>>, vector<8x384xf32>
    %294 = arith.addf %292, %293 : vector<8x384xf32>
    %295 = vector.extract_strided_slice %294 {offsets = [0, 0], sizes = [8, 128], strides = [1, 1]} : vector<8x384xf32> to vector<8x128xf32>
    %296 = vector.extract_strided_slice %294 {offsets = [0, 128], sizes = [8, 128], strides = [1, 1]} : vector<8x384xf32> to vector<8x128xf32>
    %297 = vector.extract_strided_slice %294 {offsets = [0, 256], sizes = [8, 128], strides = [1, 1]} : vector<8x384xf32> to vector<8x128xf32>
    %298 = arith.addf %296, %255 : vector<8x128xf32>
    %299 = arith.addf %259, %297 : vector<8x128xf32>
    %c0_90 = arith.constant 0 : index
    %c0_91 = arith.constant 0 : index
    %c0_92 = arith.constant 0 : index
    %300 = vector.load %arg10[%c0_90, %c0_91, %c0_92] : memref<5x8x128xf32, #tpu.memory_space<vmem>>, vector<1x8x128xf32>
    %301 = vector.shape_cast %300 : vector<1x8x128xf32> to vector<8x128xf32>
    %302 = vector.shape_cast %298 : vector<8x128xf32> to vector<1x8x128xf32>
    tpu.vector_store %arg10[%c0_90, %c0_91, %c0_92], %302 {strides = array<i32>} : memref<5x8x128xf32, #tpu.memory_space<vmem>>, vector<1x8x128xf32>,
    %303 = vector.extract_strided_slice %299 {offsets = [0, 0], sizes = [8, 32], strides = [1, 1]} : vector<8x128xf32> to vector<8x32xf32>
    %304 = vector.extract_strided_slice %295 {offsets = [0, 0], sizes = [8, 32], strides = [1, 1]} : vector<8x128xf32> to vector<8x32xf32>
    %305 = arith.addf %303, %304 : vector<8x32xf32>
    %306 = arith.negf %305 : vector<8x32xf32>
    %307 = math.exp %306 : vector<8x32xf32>
    %cst_93 = arith.constant 1.000000e+00 : f32
    %308 = vector.broadcast %cst_93 : f32 to vector<8x32xf32>
    %309 = arith.addf %308, %307 : vector<8x32xf32>
    %310 = arith.divf %308, %309 : vector<8x32xf32>
    %311 = vector.extract_strided_slice %299 {offsets = [0, 32], sizes = [8, 32], strides = [1, 1]} : vector<8x128xf32> to vector<8x32xf32>
    %312 = vector.extract_strided_slice %295 {offsets = [0, 32], sizes = [8, 32], strides = [1, 1]} : vector<8x128xf32> to vector<8x32xf32>
    %313 = arith.addf %311, %312 : vector<8x32xf32>
    %314 = arith.negf %313 : vector<8x32xf32>
    %315 = math.exp %314 : vector<8x32xf32>
    %cst_94 = arith.constant 1.000000e+00 : f32
    %316 = vector.broadcast %cst_94 : f32 to vector<8x32xf32>
    %317 = arith.addf %316, %315 : vector<8x32xf32>
    %318 = arith.divf %316, %317 : vector<8x32xf32>
    %319 = vector.extract_strided_slice %299 {offsets = [0, 64], sizes = [8, 32], strides = [1, 1]} : vector<8x128xf32> to vector<8x32xf32>
    %320 = vector.extract_strided_slice %295 {offsets = [0, 64], sizes = [8, 32], strides = [1, 1]} : vector<8x128xf32> to vector<8x32xf32>
    %321 = arith.mulf %310, %320 : vector<8x32xf32>
    %322 = arith.addf %319, %321 : vector<8x32xf32>
    %323 = math.tanh %322 : vector<8x32xf32>
    %cst_95 = arith.constant 1.000000e+00 : f32
    %324 = vector.broadcast %cst_95 : f32 to vector<8x32xf32>
    %325 = arith.subf %324, %318 : vector<8x32xf32>
    %326 = arith.mulf %325, %323 : vector<8x32xf32>
    %327 = arith.mulf %318, %290 : vector<8x32xf32>
    %328 = arith.addf %326, %327 : vector<8x32xf32>
    %c0_96 = arith.constant 0 : index
    %c0_97 = arith.constant 0 : index
    %329 = vector.load %arg8[%c0_96, %c0_97] : memref<32x384xf32, #tpu.memory_space<vmem>>, vector<32x384xf32>
    %cst_98 = arith.constant dense<0.000000e+00> : vector<8x384xf32>
    %330 = tpu.matmul %328, %329, %cst_98 {dimension_numbers = #tpu.dot_dimension_numbers<[1], [0], [0], [1], [0, 0, 1, 1], [], []>} : vector<8x32xf32>, vector<32x384xf32>, vector<8x384xf32> -> vector<8x384xf32>
    %c0_99 = arith.constant 0 : index
    %c0_100 = arith.constant 0 : index
    %331 = vector.load %arg9[%c0_99, %c0_100] : memref<8x384xf32, #tpu.memory_space<vmem>>, vector<8x384xf32>
    %332 = arith.addf %330, %331 : vector<8x384xf32>
    %333 = vector.extract_strided_slice %332 {offsets = [0, 0], sizes = [8, 128], strides = [1, 1]} : vector<8x384xf32> to vector<8x128xf32>
    %334 = vector.extract_strided_slice %332 {offsets = [0, 128], sizes = [8, 128], strides = [1, 1]} : vector<8x384xf32> to vector<8x128xf32>
    %335 = vector.extract_strided_slice %332 {offsets = [0, 256], sizes = [8, 128], strides = [1, 1]} : vector<8x384xf32> to vector<8x128xf32>
    %336 = arith.addf %334, %298 : vector<8x128xf32>
    %337 = arith.addf %299, %335 : vector<8x128xf32>
    %c1 = arith.constant 1 : index
    %c0_101 = arith.constant 0 : index
    %c0_102 = arith.constant 0 : index
    %338 = vector.load %arg10[%c1, %c0_101, %c0_102] : memref<5x8x128xf32, #tpu.memory_space<vmem>>, vector<1x8x128xf32>
    %339 = vector.shape_cast %338 : vector<1x8x128xf32> to vector<8x128xf32>
    %340 = vector.shape_cast %336 : vector<8x128xf32> to vector<1x8x128xf32>
    tpu.vector_store %arg10[%c1, %c0_101, %c0_102], %340 {strides = array<i32>} : memref<5x8x128xf32, #tpu.memory_space<vmem>>, vector<1x8x128xf32>,
    %341 = vector.extract_strided_slice %337 {offsets = [0, 0], sizes = [8, 32], strides = [1, 1]} : vector<8x128xf32> to vector<8x32xf32>
    %342 = vector.extract_strided_slice %333 {offsets = [0, 0], sizes = [8, 32], strides = [1, 1]} : vector<8x128xf32> to vector<8x32xf32>
    %343 = arith.addf %341, %342 : vector<8x32xf32>
    %344 = arith.negf %343 : vector<8x32xf32>
    %345 = math.exp %344 : vector<8x32xf32>
    %cst_103 = arith.constant 1.000000e+00 : f32
    %346 = vector.broadcast %cst_103 : f32 to vector<8x32xf32>
    %347 = arith.addf %346, %345 : vector<8x32xf32>
    %348 = arith.divf %346, %347 : vector<8x32xf32>
    %349 = vector.extract_strided_slice %337 {offsets = [0, 32], sizes = [8, 32], strides = [1, 1]} : vector<8x128xf32> to vector<8x32xf32>
    %350 = vector.extract_strided_slice %333 {offsets = [0, 32], sizes = [8, 32], strides = [1, 1]} : vector<8x128xf32> to vector<8x32xf32>
    %351 = arith.addf %349, %350 : vector<8x32xf32>
    %352 = arith.negf %351 : vector<8x32xf32>
    %353 = math.exp %352 : vector<8x32xf32>
    %cst_104 = arith.constant 1.000000e+00 : f32
    %354 = vector.broadcast %cst_104 : f32 to vector<8x32xf32>
    %355 = arith.addf %354, %353 : vector<8x32xf32>
    %356 = arith.divf %354, %355 : vector<8x32xf32>
    %357 = vector.extract_strided_slice %337 {offsets = [0, 64], sizes = [8, 32], strides = [1, 1]} : vector<8x128xf32> to vector<8x32xf32>
    %358 = vector.extract_strided_slice %333 {offsets = [0, 64], sizes = [8, 32], strides = [1, 1]} : vector<8x128xf32> to vector<8x32xf32>
    %359 = arith.mulf %348, %358 : vector<8x32xf32>
    %360 = arith.addf %357, %359 : vector<8x32xf32>
    %361 = math.tanh %360 : vector<8x32xf32>
    %cst_105 = arith.constant 1.000000e+00 : f32
    %362 = vector.broadcast %cst_105 : f32 to vector<8x32xf32>
    %363 = arith.subf %362, %356 : vector<8x32xf32>
    %364 = arith.mulf %363, %361 : vector<8x32xf32>
    %365 = arith.mulf %356, %328 : vector<8x32xf32>
    %366 = arith.addf %364, %365 : vector<8x32xf32>
    %c0_106 = arith.constant 0 : index
    %c0_107 = arith.constant 0 : index
    %367 = vector.load %arg8[%c0_106, %c0_107] : memref<32x384xf32, #tpu.memory_space<vmem>>, vector<32x384xf32>
    %cst_108 = arith.constant dense<0.000000e+00> : vector<8x384xf32>
    %368 = tpu.matmul %366, %367, %cst_108 {dimension_numbers = #tpu.dot_dimension_numbers<[1], [0], [0], [1], [0, 0, 1, 1], [], []>} : vector<8x32xf32>, vector<32x384xf32>, vector<8x384xf32> -> vector<8x384xf32>
    %c0_109 = arith.constant 0 : index
    %c0_110 = arith.constant 0 : index
    %369 = vector.load %arg9[%c0_109, %c0_110] : memref<8x384xf32, #tpu.memory_space<vmem>>, vector<8x384xf32>
    %370 = arith.addf %368, %369 : vector<8x384xf32>
    %371 = vector.extract_strided_slice %370 {offsets = [0, 0], sizes = [8, 128], strides = [1, 1]} : vector<8x384xf32> to vector<8x128xf32>
    %372 = vector.extract_strided_slice %370 {offsets = [0, 128], sizes = [8, 128], strides = [1, 1]} : vector<8x384xf32> to vector<8x128xf32>
    %373 = vector.extract_strided_slice %370 {offsets = [0, 256], sizes = [8, 128], strides = [1, 1]} : vector<8x384xf32> to vector<8x128xf32>
    %374 = arith.addf %372, %336 : vector<8x128xf32>
    %375 = arith.addf %337, %373 : vector<8x128xf32>
    %c2 = arith.constant 2 : index
    %c0_111 = arith.constant 0 : index
    %c0_112 = arith.constant 0 : index
    %376 = vector.load %arg10[%c2, %c0_111, %c0_112] : memref<5x8x128xf32, #tpu.memory_space<vmem>>, vector<1x8x128xf32>
    %377 = vector.shape_cast %376 : vector<1x8x128xf32> to vector<8x128xf32>
    %378 = vector.shape_cast %374 : vector<8x128xf32> to vector<1x8x128xf32>
    tpu.vector_store %arg10[%c2, %c0_111, %c0_112], %378 {strides = array<i32>} : memref<5x8x128xf32, #tpu.memory_space<vmem>>, vector<1x8x128xf32>,
    %379 = vector.extract_strided_slice %375 {offsets = [0, 0], sizes = [8, 32], strides = [1, 1]} : vector<8x128xf32> to vector<8x32xf32>
    %380 = vector.extract_strided_slice %371 {offsets = [0, 0], sizes = [8, 32], strides = [1, 1]} : vector<8x128xf32> to vector<8x32xf32>
    %381 = arith.addf %379, %380 : vector<8x32xf32>
    %382 = arith.negf %381 : vector<8x32xf32>
    %383 = math.exp %382 : vector<8x32xf32>
    %cst_113 = arith.constant 1.000000e+00 : f32
    %384 = vector.broadcast %cst_113 : f32 to vector<8x32xf32>
    %385 = arith.addf %384, %383 : vector<8x32xf32>
    %386 = arith.divf %384, %385 : vector<8x32xf32>
    %387 = vector.extract_strided_slice %375 {offsets = [0, 32], sizes = [8, 32], strides = [1, 1]} : vector<8x128xf32> to vector<8x32xf32>
    %388 = vector.extract_strided_slice %371 {offsets = [0, 32], sizes = [8, 32], strides = [1, 1]} : vector<8x128xf32> to vector<8x32xf32>
    %389 = arith.addf %387, %388 : vector<8x32xf32>
    %390 = arith.negf %389 : vector<8x32xf32>
    %391 = math.exp %390 : vector<8x32xf32>
    %cst_114 = arith.constant 1.000000e+00 : f32
    %392 = vector.broadcast %cst_114 : f32 to vector<8x32xf32>
    %393 = arith.addf %392, %391 : vector<8x32xf32>
    %394 = arith.divf %392, %393 : vector<8x32xf32>
    %395 = vector.extract_strided_slice %375 {offsets = [0, 64], sizes = [8, 32], strides = [1, 1]} : vector<8x128xf32> to vector<8x32xf32>
    %396 = vector.extract_strided_slice %371 {offsets = [0, 64], sizes = [8, 32], strides = [1, 1]} : vector<8x128xf32> to vector<8x32xf32>
    %397 = arith.mulf %386, %396 : vector<8x32xf32>
    %398 = arith.addf %395, %397 : vector<8x32xf32>
    %399 = math.tanh %398 : vector<8x32xf32>
    %cst_115 = arith.constant 1.000000e+00 : f32
    %400 = vector.broadcast %cst_115 : f32 to vector<8x32xf32>
    %401 = arith.subf %400, %394 : vector<8x32xf32>
    %402 = arith.mulf %401, %399 : vector<8x32xf32>
    %403 = arith.mulf %394, %366 : vector<8x32xf32>
    %404 = arith.addf %402, %403 : vector<8x32xf32>
    %c0_116 = arith.constant 0 : index
    %c0_117 = arith.constant 0 : index
    %405 = vector.load %arg8[%c0_116, %c0_117] : memref<32x384xf32, #tpu.memory_space<vmem>>, vector<32x384xf32>
    %cst_118 = arith.constant dense<0.000000e+00> : vector<8x384xf32>
    %406 = tpu.matmul %404, %405, %cst_118 {dimension_numbers = #tpu.dot_dimension_numbers<[1], [0], [0], [1], [0, 0, 1, 1], [], []>} : vector<8x32xf32>, vector<32x384xf32>, vector<8x384xf32> -> vector<8x384xf32>
    %c0_119 = arith.constant 0 : index
    %c0_120 = arith.constant 0 : index
    %407 = vector.load %arg9[%c0_119, %c0_120] : memref<8x384xf32, #tpu.memory_space<vmem>>, vector<8x384xf32>
    %408 = arith.addf %406, %407 : vector<8x384xf32>
    %409 = vector.extract_strided_slice %408 {offsets = [0, 0], sizes = [8, 128], strides = [1, 1]} : vector<8x384xf32> to vector<8x128xf32>
    %410 = vector.extract_strided_slice %408 {offsets = [0, 128], sizes = [8, 128], strides = [1, 1]} : vector<8x384xf32> to vector<8x128xf32>
    %411 = vector.extract_strided_slice %408 {offsets = [0, 256], sizes = [8, 128], strides = [1, 1]} : vector<8x384xf32> to vector<8x128xf32>
    %412 = arith.addf %410, %374 : vector<8x128xf32>
    %413 = arith.addf %375, %411 : vector<8x128xf32>
    %c3 = arith.constant 3 : index
    %c0_121 = arith.constant 0 : index
    %c0_122 = arith.constant 0 : index
    %414 = vector.load %arg10[%c3, %c0_121, %c0_122] : memref<5x8x128xf32, #tpu.memory_space<vmem>>, vector<1x8x128xf32>
    %415 = vector.shape_cast %414 : vector<1x8x128xf32> to vector<8x128xf32>
    %416 = vector.shape_cast %412 : vector<8x128xf32> to vector<1x8x128xf32>
    tpu.vector_store %arg10[%c3, %c0_121, %c0_122], %416 {strides = array<i32>} : memref<5x8x128xf32, #tpu.memory_space<vmem>>, vector<1x8x128xf32>,
    %417 = vector.extract_strided_slice %413 {offsets = [0, 0], sizes = [8, 32], strides = [1, 1]} : vector<8x128xf32> to vector<8x32xf32>
    %418 = vector.extract_strided_slice %409 {offsets = [0, 0], sizes = [8, 32], strides = [1, 1]} : vector<8x128xf32> to vector<8x32xf32>
    %419 = arith.addf %417, %418 : vector<8x32xf32>
    %420 = arith.negf %419 : vector<8x32xf32>
    %421 = math.exp %420 : vector<8x32xf32>
    %cst_123 = arith.constant 1.000000e+00 : f32
    %422 = vector.broadcast %cst_123 : f32 to vector<8x32xf32>
    %423 = arith.addf %422, %421 : vector<8x32xf32>
    %424 = arith.divf %422, %423 : vector<8x32xf32>
    %425 = vector.extract_strided_slice %413 {offsets = [0, 32], sizes = [8, 32], strides = [1, 1]} : vector<8x128xf32> to vector<8x32xf32>
    %426 = vector.extract_strided_slice %409 {offsets = [0, 32], sizes = [8, 32], strides = [1, 1]} : vector<8x128xf32> to vector<8x32xf32>
    %427 = arith.addf %425, %426 : vector<8x32xf32>
    %428 = arith.negf %427 : vector<8x32xf32>
    %429 = math.exp %428 : vector<8x32xf32>
    %cst_124 = arith.constant 1.000000e+00 : f32
    %430 = vector.broadcast %cst_124 : f32 to vector<8x32xf32>
    %431 = arith.addf %430, %429 : vector<8x32xf32>
    %432 = arith.divf %430, %431 : vector<8x32xf32>
    %433 = vector.extract_strided_slice %413 {offsets = [0, 64], sizes = [8, 32], strides = [1, 1]} : vector<8x128xf32> to vector<8x32xf32>
    %434 = vector.extract_strided_slice %409 {offsets = [0, 64], sizes = [8, 32], strides = [1, 1]} : vector<8x128xf32> to vector<8x32xf32>
    %435 = arith.mulf %424, %434 : vector<8x32xf32>
    %436 = arith.addf %433, %435 : vector<8x32xf32>
    %437 = math.tanh %436 : vector<8x32xf32>
    %cst_125 = arith.constant 1.000000e+00 : f32
    %438 = vector.broadcast %cst_125 : f32 to vector<8x32xf32>
    %439 = arith.subf %438, %432 : vector<8x32xf32>
    %440 = arith.mulf %439, %437 : vector<8x32xf32>
    %441 = arith.mulf %432, %404 : vector<8x32xf32>
    %442 = arith.addf %440, %441 : vector<8x32xf32>
    %c0_126 = arith.constant 0 : index
    %c0_127 = arith.constant 0 : index
    %443 = vector.load %arg11[%c0_126, %c0_127] : memref<8x32xf32, #tpu.memory_space<vmem>>, vector<8x32xf32>
    tpu.vector_store %arg11[%c0_126, %c0_127], %442 {strides = array<i32>} : memref<8x32xf32, #tpu.memory_space<vmem>>, vector<8x32xf32>,
    %c0_128 = arith.constant 0 : index
    %c0_129 = arith.constant 0 : index
    %444 = vector.load %arg8[%c0_128, %c0_129] : memref<32x384xf32, #tpu.memory_space<vmem>>, vector<32x384xf32>
    %cst_130 = arith.constant dense<0.000000e+00> : vector<8x384xf32>
    %445 = tpu.matmul %442, %444, %cst_130 {dimension_numbers = #tpu.dot_dimension_numbers<[1], [0], [0], [1], [0, 0, 1, 1], [], []>} : vector<8x32xf32>, vector<32x384xf32>, vector<8x384xf32> -> vector<8x384xf32>
    %c0_131 = arith.constant 0 : index
    %c0_132 = arith.constant 0 : index
    %446 = vector.load %arg9[%c0_131, %c0_132] : memref<8x384xf32, #tpu.memory_space<vmem>>, vector<8x384xf32>
    %447 = arith.addf %445, %446 : vector<8x384xf32>
    %448 = vector.extract_strided_slice %447 {offsets = [0, 128], sizes = [8, 128], strides = [1, 1]} : vector<8x384xf32> to vector<8x128xf32>
    %449 = arith.addf %448, %412 : vector<8x128xf32>
    %c4 = arith.constant 4 : index
    %c0_133 = arith.constant 0 : index
    %c0_134 = arith.constant 0 : index
    %450 = vector.load %arg10[%c4, %c0_133, %c0_134] : memref<5x8x128xf32, #tpu.memory_space<vmem>>, vector<1x8x128xf32>
    %451 = vector.shape_cast %450 : vector<1x8x128xf32> to vector<8x128xf32>
    %452 = vector.shape_cast %449 : vector<8x128xf32> to vector<1x8x128xf32>
    tpu.vector_store %arg10[%c4, %c0_133, %c0_134], %452 {strides = array<i32>} : memref<5x8x128xf32, #tpu.memory_space<vmem>>, vector<1x8x128xf32>,
    return
  }
}

</mosaic_0001>

<llo_original>
// kernel: seq2seq_forward.1
$region0: #{seq2seq_forward.1}
  #allocation0 [shape = 'u32[]', space=smem, size = 0x4, offset = 0x4, fixed_abs, tag = 'smem constant byte address 0x4 - core index']
  #allocation1 [shape = 'u32[144,128]{1,0:T(1,128)}', space=vmem, size = 0x12000, scoped, tag = 'internal scratch']
  %s0 = inlined_call_operand.vmem [shape: f32[64,16], index: 0, kind: input, shape index: {}]
  %s1 = inlined_call_operand.vmem [shape: f32[8,128], index: 1, kind: input, shape index: {}]
  %s2 = inlined_call_operand.vmem [shape: f32[16,128], index: 2, kind: input, shape index: {}]
  %s3 = inlined_call_operand.vmem [shape: f32[1,128], index: 3, kind: input, shape index: {}]
  %s4 = inlined_call_operand.vmem [shape: f32[32,128], index: 4, kind: input, shape index: {}]
  %s5 = inlined_call_operand.vmem [shape: f32[8,128], index: 5, kind: input, shape index: {}]
  %s6 = inlined_call_operand.vmem [shape: f32[128,128], index: 6, kind: input, shape index: {}]
  %s7 = inlined_call_operand.vmem [shape: f32[8,128], index: 7, kind: input, shape index: {}]
  %s8 = inlined_call_operand.vmem [shape: f32[32,384], index: 8, kind: input, shape index: {}]
  %s9 = inlined_call_operand.vmem [shape: f32[8,384], index: 9, kind: input, shape index: {}]
  %s10 = inlined_call_operand.vmem [shape: f32[5,8,128], index: 10, kind: output, shape index: {0}]
  %s11 = inlined_call_operand.vmem [shape: f32[8,32], index: 11, kind: output, shape index: {1}]
  %12 = xla_tuple %s10, %s11
  %s13 = sld [smem:[#allocation0]]
  $region58: #{seq2seq_forward.1} parent=0
    _
  %s15 = ssub.s32 1, %s13
  %s16 = scalar_select 0, %s15, %s13
  // Predicated region
  $region2: #{seq2seq_forward.1} parent=0 // pred_check
    _
  $region3: #{seq2seq_forward.1} parent=0 // pred_check_branch
    %18 = sbr.rel (0) target = $region5
  $region4: #{seq2seq_forward.1} parent=0 // pred_region
    _
  $region5: #{seq2seq_forward.1} parent=0 // pred_fallthru
    _
  // Predicated region
  $region6: #{seq2seq_forward.1} parent=0 // pred_check
    _
  $region7: #{seq2seq_forward.1} parent=0 // pred_check_branch
    %20 = sbr.rel (0) target = $region9
  $region8: #{seq2seq_forward.1} parent=0 // pred_region
    _
  $region9: #{seq2seq_forward.1} parent=0 // pred_fallthru
    _
  // Predicated region
  $region10: #{seq2seq_forward.1} parent=0 // pred_check
    _
  $region11: #{seq2seq_forward.1} parent=0 // pred_check_branch
    %22 = sbr.rel (0) target = $region13
  $region12: #{seq2seq_forward.1} parent=0 // pred_region
    _
  $region13: #{seq2seq_forward.1} parent=0 // pred_fallthru
    _
  // Predicated region
  $region14: #{seq2seq_forward.1} parent=0 // pred_check
    _
  $region15: #{seq2seq_forward.1} parent=0 // pred_check_branch
    %24 = sbr.rel (0) target = $region17
  $region16: #{seq2seq_forward.1} parent=0 // pred_region
    _
  $region17: #{seq2seq_forward.1} parent=0 // pred_fallthru
    _
  // Predicated region
  $region18: #{seq2seq_forward.1} parent=0 // pred_check
    _
  $region19: #{seq2seq_forward.1} parent=0 // pred_check_branch
    %26 = sbr.rel (0) target = $region21
  $region20: #{seq2seq_forward.1} parent=0 // pred_region
    _
  $region21: #{seq2seq_forward.1} parent=0 // pred_fallthru
    _
  // Predicated region
  $region22: #{seq2seq_forward.1} parent=0 // pred_check
    _
  $region23: #{seq2seq_forward.1} parent=0 // pred_check_branch
    %28 = sbr.rel (0) target = $region25
  $region24: #{seq2seq_forward.1} parent=0 // pred_region
    _
  $region25: #{seq2seq_forward.1} parent=0 // pred_fallthru
    _
  // Predicated region
  $region26: #{seq2seq_forward.1} parent=0 // pred_check
    _
  $region27: #{seq2seq_forward.1} parent=0 // pred_check_branch
    %30 = sbr.rel (0) target = $region29
  $region28: #{seq2seq_forward.1} parent=0 // pred_region
    _
  $region29: #{seq2seq_forward.1} parent=0 // pred_fallthru
    _
  // Predicated region
  $region30: #{seq2seq_forward.1} parent=0 // pred_check
    _
  $region31: #{seq2seq_forward.1} parent=0 // pred_check_branch
    %32 = sbr.rel (0) target = $region33
  $region32: #{seq2seq_forward.1} parent=0 // pred_region
    _
  $region33: #{seq2seq_forward.1} parent=0 // pred_fallthru
    _
  // Predicated region
  $region34: #{seq2seq_forward.1} parent=0 // pred_check
    _
  $region35: #{seq2seq_forward.1} parent=0 // pred_check_branch
    %34 = sbr.rel (0) target = $region37
  $region36: #{seq2seq_forward.1} parent=0 // pred_region
    _
  $region37: #{seq2seq_forward.1} parent=0 // pred_fallthru
    _
  // Predicated region
  $region38: #{seq2seq_forward.1} parent=0 // pred_check
    _
  $region39: #{seq2seq_forward.1} parent=0 // pred_check_branch
    %36 = sbr.rel (0) target = $region41
  $region40: #{seq2seq_forward.1} parent=0 // pred_region
    _
  $region41: #{seq2seq_forward.1} parent=0 // pred_fallthru
    _
  %v37 = vld [vmem:[%s0] sm:$0xff]
  %v38 = vld [vmem:[%s0 + $0x8] sm:$0xff]
  %v39 = vld [vmem:[%s0 + $0x10] sm:$0xff]
  %v40 = vld [vmem:[%s0 + $0x18] sm:$0xff]
  %v41 = vld [vmem:[%s0 + $0x20] sm:$0xff]
  %v42 = vld [vmem:[%s0 + $0x28] sm:$0xff]
  %v43 = vld [vmem:[%s0 + $0x30] sm:$0xff]
  %v44 = vld [vmem:[%s0 + $0x38] sm:$0xff]
  %v45 = vld [vmem:[%s2] sm:$0xff]
  %v46 = vld [vmem:[%s2 + $0x8] sm:$0xff]
  %v47 = vld [vmem:[%s3] sm:$0x1]
  %v49 = vlaneseq
  %v50 = vshrl.u32 %v49, 7
  %v51 = vsub.s32 0, %v50
  %v52 = vrot.slane %v47, %v51
  %vm54 = vcmask 130048
  %v56 = vsel %vm54, %v37, 0
  %v59 = vsel %vm54, %v38, 0
  %v62 = vsel %vm54, %v39, 0
  %v65 = vsel %vm54, %v40, 0
  %v68 = vsel %vm54, %v41, 0
  %v71 = vsel %vm54, %v42, 0
  %v74 = vsel %vm54, %v43, 0
  %v77 = vsel %vm54, %v44, 0
  %79 = vmatprep.subr.mxu0 0.0
  %80 = vmatpush1.msra.mxu0 0.0
  %81 = vmatprep.subr.mxu0 0.0
  %82 = vmatpush1.msra.mxu0 0.0
  %83 = vmatprep.subr.mxu0 0.0
  %84 = vmatpush1.msra.mxu0 0.0
  %85 = vmatprep.subr.mxu0 0.0
  %86 = vmatpush1.msra.mxu0 0.0
  %87 = vmatprep.subr.mxu0 0.0
  %88 = vmatpush1.msra.mxu0 0.0
  %89 = vmatprep.subr.mxu0 0.0
  %90 = vmatpush1.msra.mxu0 0.0
  %91 = vmatprep.subr.mxu0 0.0
  %92 = vmatpush1.msra.mxu0 0.0
  %93 = vmatprep.subr.mxu0 0.0
  %94 = vmatpush1.msra.mxu0 0.0
  %95 = vmatprep.subr.mxu0 0.0
  %96 = vmatpush1.msra.mxu0 0.0
  %97 = vmatprep.subr.mxu0 0.0
  %98 = vmatpush1.msra.mxu0 0.0
  %99 = vmatprep.subr.mxu0 0.0
  %100 = vmatpush1.msra.mxu0 0.0
  %101 = vmatprep.subr.mxu0 0.0
  %102 = vmatpush1.msra.mxu0 0.0
  %103 = vmatprep.subr.mxu0 0.0
  %104 = vmatpush1.msra.mxu0 0.0
  %105 = vmatprep.subr.mxu0 0.0
  %106 = vmatpush1.msra.mxu0 0.0
  %107 = vmatprep.subr.mxu0 0.0
  %108 = vmatpush1.msra.mxu0 %v46
  %109 = vmatprep.subr.mxu0 0.0
  %110 = vmatpush1.msra.mxu0 %v45
  %111 = vmatprep.subr.mxu0 0.0
  %112 = vmatpush2.msra.mxu0 0.0
  %113 = vmatprep.subr.mxu0 0.0
  %114 = vmatpush2.msra.mxu0 0.0
  %115 = vmatprep.subr.mxu0 0.0
  %116 = vmatpush2.msra.mxu0 0.0
  %117 = vmatprep.subr.mxu0 0.0
  %118 = vmatpush2.msra.mxu0 0.0
  %119 = vmatprep.subr.mxu0 0.0
  %120 = vmatpush2.msra.mxu0 0.0
  %121 = vmatprep.subr.mxu0 0.0
  %122 = vmatpush2.msra.mxu0 0.0
  %123 = vmatprep.subr.mxu0 0.0
  %124 = vmatpush2.msra.mxu0 0.0
  %125 = vmatprep.subr.mxu0 0.0
  %126 = vmatpush2.msra.mxu0 0.0
  %127 = vmatprep.subr.mxu0 0.0
  %128 = vmatpush2.msra.mxu0 0.0
  %129 = vmatprep.subr.mxu0 0.0
  %130 = vmatpush2.msra.mxu0 0.0
  %131 = vmatprep.subr.mxu0 0.0
  %132 = vmatpush2.msra.mxu0 0.0
  %133 = vmatprep.subr.mxu0 0.0
  %134 = vmatpush2.msra.mxu0 0.0
  %135 = vmatprep.subr.mxu0 0.0
  %136 = vmatpush2.msra.mxu0 0.0
  %137 = vmatprep.subr.mxu0 0.0
  %138 = vmatpush2.msra.mxu0 0.0
  %139 = vmatprep.subr.mxu0 0.0
  %140 = vmatpush2.msra.mxu0 0.0
  %141 = vmatprep.subr.mxu0 0.0
  %142 = vmatpush2.msra.mxu0 0.0
  %143 = vmatprep.mubr.f32.mxu0 0.0
  %144 = vmatmul.mubr.f32.gmra.mxu0 %v56
  %v145 = vpop.f32.mrf.mxu0
  %v146 = vadd.f32 %v52, %v145
  %v147 = vpop.f32.mrf.mxu0
  %148 = vmatprep.mubr.f32.mxu0 0.0
  %149 = vmatmul.mubr.f32.gmra.mxu0 %v59
  %v150 = vpop.f32.mrf.mxu0
  %v151 = vadd.f32 %v52, %v150
  %v152 = vpop.f32.mrf.mxu0
  %153 = vmatprep.mubr.f32.mxu0 0.0
  %154 = vmatmul.mubr.f32.gmra.mxu0 %v62
  %v155 = vpop.f32.mrf.mxu0
  %v156 = vadd.f32 %v52, %v155
  %v157 = vpop.f32.mrf.mxu0
  %158 = vmatprep.mubr.f32.mxu0 0.0
  %159 = vmatmul.mubr.f32.gmra.mxu0 %v65
  %v160 = vpop.f32.mrf.mxu0
  %v161 = vadd.f32 %v52, %v160
  %v162 = vpop.f32.mrf.mxu0
  %163 = vmatprep.mubr.f32.mxu0 0.0
  %164 = vmatmul.mubr.f32.gmra.mxu0 %v68
  %v165 = vpop.f32.mrf.mxu0
  %v166 = vadd.f32 %v52, %v165
  %v167 = vpop.f32.mrf.mxu0
  %168 = vmatprep.mubr.f32.mxu0 0.0
  %169 = vmatmul.mubr.f32.gmra.mxu0 %v71
  %v170 = vpop.f32.mrf.mxu0
  %v171 = vadd.f32 %v52, %v170
  %v172 = vpop.f32.mrf.mxu0
  %173 = vmatprep.mubr.f32.mxu0 0.0
  %174 = vmatmul.mubr.f32.gmra.mxu0 %v74
  %v175 = vpop.f32.mrf.mxu0
  %v176 = vadd.f32 %v52, %v175
  %v177 = vpop.f32.mrf.mxu0
  %178 = vmatprep.mubr.f32.mxu0 0.0
  %179 = vmatmul.mubr.f32.gmra.mxu0 %v77
  %v180 = vpop.f32.mrf.mxu0
  %v181 = vadd.f32 %v52, %v180
  %v182 = vpop.f32.mrf.mxu0
  %183 = vdwg.mxu0
  %v184 = vld [vmem:[%s4] sm:$0xff]
  %v185 = vld [vmem:[%s4 + $0x8] sm:$0xff]
  %v186 = vld [vmem:[%s4 + $0x10] sm:$0xff]
  %v187 = vld [vmem:[%s4 + $0x18] sm:$0xff]
  %v188 = vld [vmem:[%s5] sm:$0xff]
  %vm189 = vcmask 261120
  %v191 = vsel %vm189, 0.0, 0
  %193 = vmatprep.subr.mxu0 0.0
  %194 = vmatpush1.msra.mxu0 0.0
  %195 = vmatprep.subr.mxu0 0.0
  %196 = vmatpush1.msra.mxu0 0.0
  %197 = vmatprep.subr.mxu0 0.0
  %198 = vmatpush1.msra.mxu0 0.0
  %199 = vmatprep.subr.mxu0 0.0
  %200 = vmatpush1.msra.mxu0 0.0
  %201 = vmatprep.subr.mxu0 0.0
  %202 = vmatpush1.msra.mxu0 0.0
  %203 = vmatprep.subr.mxu0 0.0
  %204 = vmatpush1.msra.mxu0 0.0
  %205 = vmatprep.subr.mxu0 0.0
  %206 = vmatpush1.msra.mxu0 0.0
  %207 = vmatprep.subr.mxu0 0.0
  %208 = vmatpush1.msra.mxu0 0.0
  %209 = vmatprep.subr.mxu0 0.0
  %210 = vmatpush1.msra.mxu0 0.0
  %211 = vmatprep.subr.mxu0 0.0
  %212 = vmatpush1.msra.mxu0 0.0
  %213 = vmatprep.subr.mxu0 0.0
  %214 = vmatpush1.msra.mxu0 0.0
  %215 = vmatprep.subr.mxu0 0.0
  %216 = vmatpush1.msra.mxu0 0.0
  %217 = vmatprep.subr.mxu0 0.0
  %218 = vmatpush1.msra.mxu0 %v187
  %219 = vmatprep.subr.mxu0 0.0
  %220 = vmatpush1.msra.mxu0 %v186
  %221 = vmatprep.subr.mxu0 0.0
  %222 = vmatpush1.msra.mxu0 %v185
  %223 = vmatprep.subr.mxu0 0.0
  %224 = vmatpush1.msra.mxu0 %v184
  %225 = vmatprep.subr.mxu0 0.0
  %226 = vmatpush2.msra.mxu0 0.0
  %227 = vmatprep.subr.mxu0 0.0
  %228 = vmatpush2.msra.mxu0 0.0
  %229 = vmatprep.subr.mxu0 0.0
  %230 = vmatpush2.msra.mxu0 0.0
  %231 = vmatprep.subr.mxu0 0.0
  %232 = vmatpush2.msra.mxu0 0.0
  %233 = vmatprep.subr.mxu0 0.0
  %234 = vmatpush2.msra.mxu0 0.0
  %235 = vmatprep.subr.mxu0 0.0
  %236 = vmatpush2.msra.mxu0 0.0
  %237 = vmatprep.subr.mxu0 0.0
  %238 = vmatpush2.msra.mxu0 0.0
  %239 = vmatprep.subr.mxu0 0.0
  %240 = vmatpush2.msra.mxu0 0.0
  %241 = vmatprep.subr.mxu0 0.0
  %242 = vmatpush2.msra.mxu0 0.0
  %243 = vmatprep.subr.mxu0 0.0
  %244 = vmatpush2.msra.mxu0 0.0
  %245 = vmatprep.subr.mxu0 0.0
  %246 = vmatpush2.msra.mxu0 0.0
  %247 = vmatprep.subr.mxu0 0.0
  %248 = vmatpush2.msra.mxu0 0.0
  %249 = vmatprep.subr.mxu0 0.0
  %250 = vmatpush2.msra.mxu0 0.0
  %251 = vmatprep.subr.mxu0 0.0
  %252 = vmatpush2.msra.mxu0 0.0
  %253 = vmatprep.subr.mxu0 0.0
  %254 = vmatpush2.msra.mxu0 0.0
  %255 = vmatprep.subr.mxu0 0.0
  %256 = vmatpush2.msra.mxu0 0.0
  %257 = vmatprep.mubr.f32.mxu0 0.0
  %258 = vmatmul.mubr.f32.gmra.mxu0 %v191
  %v259 = vpop.f32.mrf.mxu0
  %v260 = vadd.f32 %v188, %v259
  %v261 = vpop.f32.mrf.mxu0
  %262 = vdwg.mxu0
  %v263 = vadd.f32 %v146, %v260
  %v264 = vxor.u32 %v263, 2147483648
  %v265 = vmul.f32 %v264, 1.442695
  %v266 = vpow.pop %v265
  %v267 = vadd.f32 %v266, 1.0
  %v268 = vrcp.pop %v267
  %v269 = vmul.f32 1.0, %v268
  %271 = vrot.lane.b32.xlu0 %v260, 64
  %v272 = vpop.permute.xlu0 %271
  %v274 = vmul.f32 %v269, %v272
  %276 = vrot.lane.b32.xlu0 %v274, 64
  %v277 = vpop.permute.xlu0 %276
  %v279 = vadd.f32 %v146, %v277
  %v280 = vtanh.pop %v279
  %v281 = vsub.f32 1.0, %v269
  %283 = vrot.lane.b32.xlu0 %v280, 96
  %v284 = vpop.permute.xlu0 %283
  %v286 = vmul.f32 %v281, %v284
  %v287 = vmul.f32 %v269, 0.0
  %v288 = vadd.f32 %v286, %v287
  %290 = vrot.lane.b32.xlu0 %v288, 96
  %v291 = vpop.permute.xlu0 %290
  %v292 = vsel %vm189, %v291, 0
  %294 = vmatprep.subr.mxu0 0.0
  %295 = vmatpush1.msra.mxu0 0.0
  %296 = vmatprep.subr.mxu0 0.0
  %297 = vmatpush1.msra.mxu0 0.0
  %298 = vmatprep.subr.mxu0 0.0
  %299 = vmatpush1.msra.mxu0 0.0
  %300 = vmatprep.subr.mxu0 0.0
  %301 = vmatpush1.msra.mxu0 0.0
  %302 = vmatprep.subr.mxu0 0.0
  %303 = vmatpush1.msra.mxu0 0.0
  %304 = vmatprep.subr.mxu0 0.0
  %305 = vmatpush1.msra.mxu0 0.0
  %306 = vmatprep.subr.mxu0 0.0
  %307 = vmatpush1.msra.mxu0 0.0
  %308 = vmatprep.subr.mxu0 0.0
  %309 = vmatpush1.msra.mxu0 0.0
  %310 = vmatprep.subr.mxu0 0.0
  %311 = vmatpush1.msra.mxu0 0.0
  %312 = vmatprep.subr.mxu0 0.0
  %313 = vmatpush1.msra.mxu0 0.0
  %314 = vmatprep.subr.mxu0 0.0
  %315 = vmatpush1.msra.mxu0 0.0
  %316 = vmatprep.subr.mxu0 0.0
  %317 = vmatpush1.msra.mxu0 0.0
  %318 = vmatprep.subr.mxu0 0.0
  %319 = vmatpush1.msra.mxu0 %v187
  %320 = vmatprep.subr.mxu0 0.0
  %321 = vmatpush1.msra.mxu0 %v186
  %322 = vmatprep.subr.mxu0 0.0
  %323 = vmatpush1.msra.mxu0 %v185
  %324 = vmatprep.subr.mxu0 0.0
  %325 = vmatpush1.msra.mxu0 %v184
  %326 = vmatprep.subr.mxu0 0.0
  %327 = vmatpush2.msra.mxu0 0.0
  %328 = vmatprep.subr.mxu0 0.0
  %329 = vmatpush2.msra.mxu0 0.0
  %330 = vmatprep.subr.mxu0 0.0
  %331 = vmatpush2.msra.mxu0 0.0
  %332 = vmatprep.subr.mxu0 0.0
  %333 = vmatpush2.msra.mxu0 0.0
  %334 = vmatprep.subr.mxu0 0.0
  %335 = vmatpush2.msra.mxu0 0.0
  %336 = vmatprep.subr.mxu0 0.0
  %337 = vmatpush2.msra.mxu0 0.0
  %338 = vmatprep.subr.mxu0 0.0
  %339 = vmatpush2.msra.mxu0 0.0
  %340 = vmatprep.subr.mxu0 0.0
  %341 = vmatpush2.msra.mxu0 0.0
  %342 = vmatprep.subr.mxu0 0.0
  %343 = vmatpush2.msra.mxu0 0.0
  %344 = vmatprep.subr.mxu0 0.0
  %345 = vmatpush2.msra.mxu0 0.0
  %346 = vmatprep.subr.mxu0 0.0
  %347 = vmatpush2.msra.mxu0 0.0
  %348 = vmatprep.subr.mxu0 0.0
  %349 = vmatpush2.msra.mxu0 0.0
  %350 = vmatprep.subr.mxu0 0.0
  %351 = vmatpush2.msra.mxu0 0.0
  %352 = vmatprep.subr.mxu0 0.0
  %353 = vmatpush2.msra.mxu0 0.0
  %354 = vmatprep.subr.mxu0 0.0
  %355 = vmatpush2.msra.mxu0 0.0
  %356 = vmatprep.subr.mxu0 0.0
  %357 = vmatpush2.msra.mxu0 0.0
  %358 = vmatprep.mubr.f32.mxu0 0.0
  %359 = vmatmul.mubr.f32.gmra.mxu0 %v292
  %v360 = vpop.f32.mrf.mxu0
  %v361 = vadd.f32 %v188, %v360
  %v362 = vpop.f32.mrf.mxu0
  %363 = vdwg.mxu0
  %v364 = vadd.f32 %v151, %v361
  %v365 = vxor.u32 %v364, 2147483648
  %v366 = vmul.f32 %v365, 1.442695
  %v367 = vpow.pop %v366
  %v368 = vadd.f32 %v367, 1.0
  %v369 = vrcp.pop %v368
  %v370 = vmul.f32 1.0, %v369
  %372 = vrot.lane.b32.xlu0 %v361, 64
  %v373 = vpop.permute.xlu0 %372
  %v375 = vmul.f32 %v370, %v373
  %377 = vrot.lane.b32.xlu0 %v375, 64
  %v378 = vpop.permute.xlu0 %377
  %v380 = vadd.f32 %v151, %v378
  %v381 = vtanh.pop %v380
  %v382 = vsub.f32 1.0, %v370
  %384 = vrot.lane.b32.xlu0 %v381, 96
  %v385 = vpop.permute.xlu0 %384
  %v387 = vmul.f32 %v382, %v385
  %v388 = vmul.f32 %v370, %v288
  %v389 = vadd.f32 %v387, %v388
  %391 = vrot.lane.b32.xlu0 %v389, 96
  %v392 = vpop.permute.xlu0 %391
  %v393 = vsel %vm189, %v392, 0
  %395 = vmatprep.subr.mxu0 0.0
  %396 = vmatpush1.msra.mxu0 0.0
  %397 = vmatprep.subr.mxu0 0.0
  %398 = vmatpush1.msra.mxu0 0.0
  %399 = vmatprep.subr.mxu0 0.0
  %400 = vmatpush1.msra.mxu0 0.0
  %401 = vmatprep.subr.mxu0 0.0
  %402 = vmatpush1.msra.mxu0 0.0
  %403 = vmatprep.subr.mxu0 0.0
  %404 = vmatpush1.msra.mxu0 0.0
  %405 = vmatprep.subr.mxu0 0.0
  %406 = vmatpush1.msra.mxu0 0.0
  %407 = vmatprep.subr.mxu0 0.0
  %408 = vmatpush1.msra.mxu0 0.0
  %409 = vmatprep.subr.mxu0 0.0
  %410 = vmatpush1.msra.mxu0 0.0
  %411 = vmatprep.subr.mxu0 0.0
  %412 = vmatpush1.msra.mxu0 0.0
  %413 = vmatprep.subr.mxu0 0.0
  %414 = vmatpush1.msra.mxu0 0.0
  %415 = vmatprep.subr.mxu0 0.0
  %416 = vmatpush1.msra.mxu0 0.0
  %417 = vmatprep.subr.mxu0 0.0
  %418 = vmatpush1.msra.mxu0 0.0
  %419 = vmatprep.subr.mxu0 0.0
  %420 = vmatpush1.msra.mxu0 %v187
  %421 = vmatprep.subr.mxu0 0.0
  %422 = vmatpush1.msra.mxu0 %v186
  %423 = vmatprep.subr.mxu0 0.0
  %424 = vmatpush1.msra.mxu0 %v185
  %425 = vmatprep.subr.mxu0 0.0
  %426 = vmatpush1.msra.mxu0 %v184
  %427 = vmatprep.subr.mxu0 0.0
  %428 = vmatpush2.msra.mxu0 0.0
  %429 = vmatprep.subr.mxu0 0.0
  %430 = vmatpush2.msra.mxu0 0.0
  %431 = vmatprep.subr.mxu0 0.0
  %432 = vmatpush2.msra.mxu0 0.0
  %433 = vmatprep.subr.mxu0 0.0
  %434 = vmatpush2.msra.mxu0 0.0
  %435 = vmatprep.subr.mxu0 0.0
  %436 = vmatpush2.msra.mxu0 0.0
  %437 = vmatprep.subr.mxu0 0.0
  %438 = vmatpush2.msra.mxu0 0.0
  %439 = vmatprep.subr.mxu0 0.0
  %440 = vmatpush2.msra.mxu0 0.0
  %441 = vmatprep.subr.mxu0 0.0
  %442 = vmatpush2.msra.mxu0 0.0
  %443 = vmatprep.subr.mxu0 0.0
  %444 = vmatpush2.msra.mxu0 0.0
  %445 = vmatprep.subr.mxu0 0.0
  %446 = vmatpush2.msra.mxu0 0.0
  %447 = vmatprep.subr.mxu0 0.0
  %448 = vmatpush2.msra.mxu0 0.0
  %449 = vmatprep.subr.mxu0 0.0
  %450 = vmatpush2.msra.mxu0 0.0
  %451 = vmatprep.subr.mxu0 0.0
  %452 = vmatpush2.msra.mxu0 0.0
  %453 = vmatprep.subr.mxu0 0.0
  %454 = vmatpush2.msra.mxu0 0.0
  %455 = vmatprep.subr.mxu0 0.0
  %456 = vmatpush2.msra.mxu0 0.0
  %457 = vmatprep.subr.mxu0 0.0
  %458 = vmatpush2.msra.mxu0 0.0
  %459 = vmatprep.mubr.f32.mxu0 0.0
  %460 = vmatmul.mubr.f32.gmra.mxu0 %v393
  %v461 = vpop.f32.mrf.mxu0
  %v462 = vadd.f32 %v188, %v461
  %v463 = vpop.f32.mrf.mxu0
  %464 = vdwg.mxu0
  %v465 = vadd.f32 %v156, %v462
  %v466 = vxor.u32 %v465, 2147483648
  %v467 = vmul.f32 %v466, 1.442695
  %v468 = vpow.pop %v467
  %v469 = vadd.f32 %v468, 1.0
  %v470 = vrcp.pop %v469
  %v471 = vmul.f32 1.0, %v470
  %473 = vrot.lane.b32.xlu0 %v462, 64
  %v474 = vpop.permute.xlu0 %473
  %v476 = vmul.f32 %v471, %v474
  %478 = vrot.lane.b32.xlu0 %v476, 64
  %v479 = vpop.permute.xlu0 %478
  %v481 = vadd.f32 %v156, %v479
  %v482 = vtanh.pop %v481
  %v483 = vsub.f32 1.0, %v471
  %485 = vrot.lane.b32.xlu0 %v482, 96
  %v486 = vpop.permute.xlu0 %485
  %v488 = vmul.f32 %v483, %v486
  %v489 = vmul.f32 %v471, %v389
  %v490 = vadd.f32 %v488, %v489
  %492 = vrot.lane.b32.xlu0 %v490, 96
  %v493 = vpop.permute.xlu0 %492
  %v494 = vsel %vm189, %v493, 0
  %496 = vmatprep.subr.mxu0 0.0
  %497 = vmatpush1.msra.mxu0 0.0
  %498 = vmatprep.subr.mxu0 0.0
  %499 = vmatpush1.msra.mxu0 0.0
  %500 = vmatprep.subr.mxu0 0.0
  %501 = vmatpush1.msra.mxu0 0.0
  %502 = vmatprep.subr.mxu0 0.0
  %503 = vmatpush1.msra.mxu0 0.0
  %504 = vmatprep.subr.mxu0 0.0
  %505 = vmatpush1.msra.mxu0 0.0
  %506 = vmatprep.subr.mxu0 0.0
  %507 = vmatpush1.msra.mxu0 0.0
  %508 = vmatprep.subr.mxu0 0.0
  %509 = vmatpush1.msra.mxu0 0.0
  %510 = vmatprep.subr.mxu0 0.0
  %511 = vmatpush1.msra.mxu0 0.0
  %512 = vmatprep.subr.mxu0 0.0
  %513 = vmatpush1.msra.mxu0 0.0
  %514 = vmatprep.subr.mxu0 0.0
  %515 = vmatpush1.msra.mxu0 0.0
  %516 = vmatprep.subr.mxu0 0.0
  %517 = vmatpush1.msra.mxu0 0.0
  %518 = vmatprep.subr.mxu0 0.0
  %519 = vmatpush1.msra.mxu0 0.0
  %520 = vmatprep.subr.mxu0 0.0
  %521 = vmatpush1.msra.mxu0 %v187
  %522 = vmatprep.subr.mxu0 0.0
  %523 = vmatpush1.msra.mxu0 %v186
  %524 = vmatprep.subr.mxu0 0.0
  %525 = vmatpush1.msra.mxu0 %v185
  %526 = vmatprep.subr.mxu0 0.0
  %527 = vmatpush1.msra.mxu0 %v184
  %528 = vmatprep.subr.mxu0 0.0
  %529 = vmatpush2.msra.mxu0 0.0
  %530 = vmatprep.subr.mxu0 0.0
  %531 = vmatpush2.msra.mxu0 0.0
  %532 = vmatprep.subr.mxu0 0.0
  %533 = vmatpush2.msra.mxu0 0.0
  %534 = vmatprep.subr.mxu0 0.0
  %535 = vmatpush2.msra.mxu0 0.0
  %536 = vmatprep.subr.mxu0 0.0
  %537 = vmatpush2.msra.mxu0 0.0
  %538 = vmatprep.subr.mxu0 0.0
  %539 = vmatpush2.msra.mxu0 0.0
  %540 = vmatprep.subr.mxu0 0.0
  %541 = vmatpush2.msra.mxu0 0.0
  %542 = vmatprep.subr.mxu0 0.0
  %543 = vmatpush2.msra.mxu0 0.0
  %544 = vmatprep.subr.mxu0 0.0
  %545 = vmatpush2.msra.mxu0 0.0
  %546 = vmatprep.subr.mxu0 0.0
  %547 = vmatpush2.msra.mxu0 0.0
  %548 = vmatprep.subr.mxu0 0.0
  %549 = vmatpush2.msra.mxu0 0.0
  %550 = vmatprep.subr.mxu0 0.0
  %551 = vmatpush2.msra.mxu0 0.0
  %552 = vmatprep.subr.mxu0 0.0
  %553 = vmatpush2.msra.mxu0 0.0
  %554 = vmatprep.subr.mxu0 0.0
  %555 = vmatpush2.msra.mxu0 0.0
  %556 = vmatprep.subr.mxu0 0.0
  %557 = vmatpush2.msra.mxu0 0.0
  %558 = vmatprep.subr.mxu0 0.0
  %559 = vmatpush2.msra.mxu0 0.0
  %560 = vmatprep.mubr.f32.mxu0 0.0
  %561 = vmatmul.mubr.f32.gmra.mxu0 %v494
  %v562 = vpop.f32.mrf.mxu0
  %v563 = vadd.f32 %v188, %v562
  %v564 = vpop.f32.mrf.mxu0
  %565 = vdwg.mxu0
  %v566 = vadd.f32 %v161, %v563
  %v567 = vxor.u32 %v566, 2147483648
  %v568 = vmul.f32 %v567, 1.442695
  %v569 = vpow.pop %v568
  %v570 = vadd.f32 %v569, 1.0
  %v571 = vrcp.pop %v570
  %v572 = vmul.f32 1.0, %v571
  %574 = vrot.lane.b32.xlu0 %v563, 64
  %v575 = vpop.permute.xlu0 %574
  %v577 = vmul.f32 %v572, %v575
  %579 = vrot.lane.b32.xlu0 %v577, 64
  %v580 = vpop.permute.xlu0 %579
  %v582 = vadd.f32 %v161, %v580
  %v583 = vtanh.pop %v582
  %v584 = vsub.f32 1.0, %v572
  %586 = vrot.lane.b32.xlu0 %v583, 96
  %v587 = vpop.permute.xlu0 %586
  %v589 = vmul.f32 %v584, %v587
  %v590 = vmul.f32 %v572, %v490
  %v591 = vadd.f32 %v589, %v590
  %593 = vrot.lane.b32.xlu0 %v591, 96
  %v594 = vpop.permute.xlu0 %593
  %v595 = vsel %vm189, %v594, 0
  %597 = vmatprep.subr.mxu0 0.0
  %598 = vmatpush1.msra.mxu0 0.0
  %599 = vmatprep.subr.mxu0 0.0
  %600 = vmatpush1.msra.mxu0 0.0
  %601 = vmatprep.subr.mxu0 0.0
  %602 = vmatpush1.msra.mxu0 0.0
  %603 = vmatprep.subr.mxu0 0.0
  %604 = vmatpush1.msra.mxu0 0.0
  %605 = vmatprep.subr.mxu0 0.0
  %606 = vmatpush1.msra.mxu0 0.0
  %607 = vmatprep.subr.mxu0 0.0
  %608 = vmatpush1.msra.mxu0 0.0
  %609 = vmatprep.subr.mxu0 0.0
  %610 = vmatpush1.msra.mxu0 0.0
  %611 = vmatprep.subr.mxu0 0.0
  %612 = vmatpush1.msra.mxu0 0.0
  %613 = vmatprep.subr.mxu0 0.0
  %614 = vmatpush1.msra.mxu0 0.0
  %615 = vmatprep.subr.mxu0 0.0
  %616 = vmatpush1.msra.mxu0 0.0
  %617 = vmatprep.subr.mxu0 0.0
  %618 = vmatpush1.msra.mxu0 0.0
  %619 = vmatprep.subr.mxu0 0.0
  %620 = vmatpush1.msra.mxu0 0.0
  %621 = vmatprep.subr.mxu0 0.0
  %622 = vmatpush1.msra.mxu0 %v187
  %623 = vmatprep.subr.mxu0 0.0
  %624 = vmatpush1.msra.mxu0 %v186
  %625 = vmatprep.subr.mxu0 0.0
  %626 = vmatpush1.msra.mxu0 %v185
  %627 = vmatprep.subr.mxu0 0.0
  %628 = vmatpush1.msra.mxu0 %v184
  %629 = vmatprep.subr.mxu0 0.0
  %630 = vmatpush2.msra.mxu0 0.0
  %631 = vmatprep.subr.mxu0 0.0
  %632 = vmatpush2.msra.mxu0 0.0
  %633 = vmatprep.subr.mxu0 0.0
  %634 = vmatpush2.msra.mxu0 0.0
  %635 = vmatprep.subr.mxu0 0.0
  %636 = vmatpush2.msra.mxu0 0.0
  %637 = vmatprep.subr.mxu0 0.0
  %638 = vmatpush2.msra.mxu0 0.0
  %639 = vmatprep.subr.mxu0 0.0
  %640 = vmatpush2.msra.mxu0 0.0
  %641 = vmatprep.subr.mxu0 0.0
  %642 = vmatpush2.msra.mxu0 0.0
  %643 = vmatprep.subr.mxu0 0.0
  %644 = vmatpush2.msra.mxu0 0.0
  %645 = vmatprep.subr.mxu0 0.0
  %646 = vmatpush2.msra.mxu0 0.0
  %647 = vmatprep.subr.mxu0 0.0
  %648 = vmatpush2.msra.mxu0 0.0
  %649 = vmatprep.subr.mxu0 0.0
  %650 = vmatpush2.msra.mxu0 0.0
  %651 = vmatprep.subr.mxu0 0.0
  %652 = vmatpush2.msra.mxu0 0.0
  %653 = vmatprep.subr.mxu0 0.0
  %654 = vmatpush2.msra.mxu0 0.0
  %655 = vmatprep.subr.mxu0 0.0
  %656 = vmatpush2.msra.mxu0 0.0
  %657 = vmatprep.subr.mxu0 0.0
  %658 = vmatpush2.msra.mxu0 0.0
  %659 = vmatprep.subr.mxu0 0.0
  %660 = vmatpush2.msra.mxu0 0.0
  %661 = vmatprep.mubr.f32.mxu0 0.0
  %662 = vmatmul.mubr.f32.gmra.mxu0 %v595
  %v663 = vpop.f32.mrf.mxu0
  %v664 = vadd.f32 %v188, %v663
  %v665 = vpop.f32.mrf.mxu0
  %666 = vdwg.mxu0
  %v667 = vadd.f32 %v166, %v664
  %v668 = vxor.u32 %v667, 2147483648
  %v669 = vmul.f32 %v668, 1.442695
  %v670 = vpow.pop %v669
  %v671 = vadd.f32 %v670, 1.0
  %v672 = vrcp.pop %v671
  %v673 = vmul.f32 1.0, %v672
  %675 = vrot.lane.b32.xlu0 %v664, 64
  %v676 = vpop.permute.xlu0 %675
  %v678 = vmul.f32 %v673, %v676
  %680 = vrot.lane.b32.xlu0 %v678, 64
  %v681 = vpop.permute.xlu0 %680
  %v683 = vadd.f32 %v166, %v681
  %v684 = vtanh.pop %v683
  %v685 = vsub.f32 1.0, %v673
  %687 = vrot.lane.b32.xlu0 %v684, 96
  %v688 = vpop.permute.xlu0 %687
  %v690 = vmul.f32 %v685, %v688
  %v691 = vmul.f32 %v673, %v591
  %v692 = vadd.f32 %v690, %v691
  %694 = vrot.lane.b32.xlu0 %v692, 96
  %v695 = vpop.permute.xlu0 %694
  %v696 = vsel %vm189, %v695, 0
  %698 = vmatprep.subr.mxu0 0.0
  %699 = vmatpush1.msra.mxu0 0.0
  %700 = vmatprep.subr.mxu0 0.0
  %701 = vmatpush1.msra.mxu0 0.0
  %702 = vmatprep.subr.mxu0 0.0
  %703 = vmatpush1.msra.mxu0 0.0
  %704 = vmatprep.subr.mxu0 0.0
  %705 = vmatpush1.msra.mxu0 0.0
  %706 = vmatprep.subr.mxu0 0.0
  %707 = vmatpush1.msra.mxu0 0.0
  %708 = vmatprep.subr.mxu0 0.0
  %709 = vmatpush1.msra.mxu0 0.0
  %710 = vmatprep.subr.mxu0 0.0
  %711 = vmatpush1.msra.mxu0 0.0
  %712 = vmatprep.subr.mxu0 0.0
  %713 = vmatpush1.msra.mxu0 0.0
  %714 = vmatprep.subr.mxu0 0.0
  %715 = vmatpush1.msra.mxu0 0.0
  %716 = vmatprep.subr.mxu0 0.0
  %717 = vmatpush1.msra.mxu0 0.0
  %718 = vmatprep.subr.mxu0 0.0
  %719 = vmatpush1.msra.mxu0 0.0
  %720 = vmatprep.subr.mxu0 0.0
  %721 = vmatpush1.msra.mxu0 0.0
  %722 = vmatprep.subr.mxu0 0.0
  %723 = vmatpush1.msra.mxu0 %v187
  %724 = vmatprep.subr.mxu0 0.0
  %725 = vmatpush1.msra.mxu0 %v186
  %726 = vmatprep.subr.mxu0 0.0
  %727 = vmatpush1.msra.mxu0 %v185
  %728 = vmatprep.subr.mxu0 0.0
  %729 = vmatpush1.msra.mxu0 %v184
  %730 = vmatprep.subr.mxu0 0.0
  %731 = vmatpush2.msra.mxu0 0.0
  %732 = vmatprep.subr.mxu0 0.0
  %733 = vmatpush2.msra.mxu0 0.0
  %734 = vmatprep.subr.mxu0 0.0
  %735 = vmatpush2.msra.mxu0 0.0
  %736 = vmatprep.subr.mxu0 0.0
  %737 = vmatpush2.msra.mxu0 0.0
  %738 = vmatprep.subr.mxu0 0.0
  %739 = vmatpush2.msra.mxu0 0.0
  %740 = vmatprep.subr.mxu0 0.0
  %741 = vmatpush2.msra.mxu0 0.0
  %742 = vmatprep.subr.mxu0 0.0
  %743 = vmatpush2.msra.mxu0 0.0
  %744 = vmatprep.subr.mxu0 0.0
  %745 = vmatpush2.msra.mxu0 0.0
  %746 = vmatprep.subr.mxu0 0.0
  %747 = vmatpush2.msra.mxu0 0.0
  %748 = vmatprep.subr.mxu0 0.0
  %749 = vmatpush2.msra.mxu0 0.0
  %750 = vmatprep.subr.mxu0 0.0
  %751 = vmatpush2.msra.mxu0 0.0
  %752 = vmatprep.subr.mxu0 0.0
  %753 = vmatpush2.msra.mxu0 0.0
  %754 = vmatprep.subr.mxu0 0.0
  %755 = vmatpush2.msra.mxu0 0.0
  %756 = vmatprep.subr.mxu0 0.0
  %757 = vmatpush2.msra.mxu0 0.0
  %758 = vmatprep.subr.mxu0 0.0
  %759 = vmatpush2.msra.mxu0 0.0
  %760 = vmatprep.subr.mxu0 0.0
  %761 = vmatpush2.msra.mxu0 0.0
  %762 = vmatprep.mubr.f32.mxu0 0.0
  %763 = vmatmul.mubr.f32.gmra.mxu0 %v696
  %v764 = vpop.f32.mrf.mxu0
  %v765 = vadd.f32 %v188, %v764
  %v766 = vpop.f32.mrf.mxu0
  %767 = vdwg.mxu0
  %v768 = vadd.f32 %v171, %v765
  %v769 = vxor.u32 %v768, 2147483648
  %v770 = vmul.f32 %v769, 1.442695
  %v771 = vpow.pop %v770
  %v772 = vadd.f32 %v771, 1.0
  %v773 = vrcp.pop %v772
  %v774 = vmul.f32 1.0, %v773
  %776 = vrot.lane.b32.xlu0 %v765, 64
  %v777 = vpop.permute.xlu0 %776
  %v779 = vmul.f32 %v774, %v777
  %781 = vrot.lane.b32.xlu0 %v779, 64
  %v782 = vpop.permute.xlu0 %781
  %v784 = vadd.f32 %v171, %v782
  %v785 = vtanh.pop %v784
  %v786 = vsub.f32 1.0, %v774
  %788 = vrot.lane.b32.xlu0 %v785, 96
  %v789 = vpop.permute.xlu0 %788
  %v791 = vmul.f32 %v786, %v789
  %v792 = vmul.f32 %v774, %v692
  %v793 = vadd.f32 %v791, %v792
  %795 = vrot.lane.b32.xlu0 %v793, 96
  %v796 = vpop.permute.xlu0 %795
  %v797 = vsel %vm189, %v796, 0
  %799 = vmatprep.subr.mxu0 0.0
  %800 = vmatpush1.msra.mxu0 0.0
  %801 = vmatprep.subr.mxu0 0.0
  %802 = vmatpush1.msra.mxu0 0.0
  %803 = vmatprep.subr.mxu0 0.0
  %804 = vmatpush1.msra.mxu0 0.0
  %805 = vmatprep.subr.mxu0 0.0
  %806 = vmatpush1.msra.mxu0 0.0
  %807 = vmatprep.subr.mxu0 0.0
  %808 = vmatpush1.msra.mxu0 0.0
  %809 = vmatprep.subr.mxu0 0.0
  %810 = vmatpush1.msra.mxu0 0.0
  %811 = vmatprep.subr.mxu0 0.0
  %812 = vmatpush1.msra.mxu0 0.0
  %813 = vmatprep.subr.mxu0 0.0
  %814 = vmatpush1.msra.mxu0 0.0
  %815 = vmatprep.subr.mxu0 0.0
  %816 = vmatpush1.msra.mxu0 0.0
  %817 = vmatprep.subr.mxu0 0.0
  %818 = vmatpush1.msra.mxu0 0.0
  %819 = vmatprep.subr.mxu0 0.0
  %820 = vmatpush1.msra.mxu0 0.0
  %821 = vmatprep.subr.mxu0 0.0
  %822 = vmatpush1.msra.mxu0 0.0
  %823 = vmatprep.subr.mxu0 0.0
  %824 = vmatpush1.msra.mxu0 %v187
  %825 = vmatprep.subr.mxu0 0.0
  %826 = vmatpush1.msra.mxu0 %v186
  %827 = vmatprep.subr.mxu0 0.0
  %828 = vmatpush1.msra.mxu0 %v185
  %829 = vmatprep.subr.mxu0 0.0
  %830 = vmatpush1.msra.mxu0 %v184
  %831 = vmatprep.subr.mxu0 0.0
  %832 = vmatpush2.msra.mxu0 0.0
  %833 = vmatprep.subr.mxu0 0.0
  %834 = vmatpush2.msra.mxu0 0.0
  %835 = vmatprep.subr.mxu0 0.0
  %836 = vmatpush2.msra.mxu0 0.0
  %837 = vmatprep.subr.mxu0 0.0
  %838 = vmatpush2.msra.mxu0 0.0
  %839 = vmatprep.subr.mxu0 0.0
  %840 = vmatpush2.msra.mxu0 0.0
  %841 = vmatprep.subr.mxu0 0.0
  %842 = vmatpush2.msra.mxu0 0.0
  %843 = vmatprep.subr.mxu0 0.0
  %844 = vmatpush2.msra.mxu0 0.0
  %845 = vmatprep.subr.mxu0 0.0
  %846 = vmatpush2.msra.mxu0 0.0
  %847 = vmatprep.subr.mxu0 0.0
  %848 = vmatpush2.msra.mxu0 0.0
  %849 = vmatprep.subr.mxu0 0.0
  %850 = vmatpush2.msra.mxu0 0.0
  %851 = vmatprep.subr.mxu0 0.0
  %852 = vmatpush2.msra.mxu0 0.0
  %853 = vmatprep.subr.mxu0 0.0
  %854 = vmatpush2.msra.mxu0 0.0
  %855 = vmatprep.subr.mxu0 0.0
  %856 = vmatpush2.msra.mxu0 0.0
  %857 = vmatprep.subr.mxu0 0.0
  %858 = vmatpush2.msra.mxu0 0.0
  %859 = vmatprep.subr.mxu0 0.0
  %860 = vmatpush2.msra.mxu0 0.0
  %861 = vmatprep.subr.mxu0 0.0
  %862 = vmatpush2.msra.mxu0 0.0
  %863 = vmatprep.mubr.f32.mxu0 0.0
  %864 = vmatmul.mubr.f32.gmra.mxu0 %v797
  %v865 = vpop.f32.mrf.mxu0
  %v866 = vadd.f32 %v188, %v865
  %v867 = vpop.f32.mrf.mxu0
  %868 = vdwg.mxu0
  %v869 = vadd.f32 %v176, %v866
  %v870 = vxor.u32 %v869, 2147483648
  %v871 = vmul.f32 %v870, 1.442695
  %v872 = vpow.pop %v871
  %v873 = vadd.f32 %v872, 1.0
  %v874 = vrcp.pop %v873
  %v875 = vmul.f32 1.0, %v874
  %877 = vrot.lane.b32.xlu0 %v866, 64
  %v878 = vpop.permute.xlu0 %877
  %v880 = vmul.f32 %v875, %v878
  %882 = vrot.lane.b32.xlu0 %v880, 64
  %v883 = vpop.permute.xlu0 %882
  %v885 = vadd.f32 %v176, %v883
  %v886 = vtanh.pop %v885
  %v887 = vsub.f32 1.0, %v875
  %889 = vrot.lane.b32.xlu0 %v886, 96
  %v890 = vpop.permute.xlu0 %889
  %v892 = vmul.f32 %v887, %v890
  %v893 = vmul.f32 %v875, %v793
  %v894 = vadd.f32 %v892, %v893
  %896 = vrot.lane.b32.xlu0 %v894, 96
  %v897 = vpop.permute.xlu0 %896
  %v898 = vsel %vm189, %v897, 0
  %900 = vmatprep.subr.mxu0 0.0
  %901 = vmatpush1.msra.mxu0 0.0
  %902 = vmatprep.subr.mxu0 0.0
  %903 = vmatpush1.msra.mxu0 0.0
  %904 = vmatprep.subr.mxu0 0.0
  %905 = vmatpush1.msra.mxu0 0.0
  %906 = vmatprep.subr.mxu0 0.0
  %907 = vmatpush1.msra.mxu0 0.0
  %908 = vmatprep.subr.mxu0 0.0
  %909 = vmatpush1.msra.mxu0 0.0
  %910 = vmatprep.subr.mxu0 0.0
  %911 = vmatpush1.msra.mxu0 0.0
  %912 = vmatprep.subr.mxu0 0.0
  %913 = vmatpush1.msra.mxu0 0.0
  %914 = vmatprep.subr.mxu0 0.0
  %915 = vmatpush1.msra.mxu0 0.0
  %916 = vmatprep.subr.mxu0 0.0
  %917 = vmatpush1.msra.mxu0 0.0
  %918 = vmatprep.subr.mxu0 0.0
  %919 = vmatpush1.msra.mxu0 0.0
  %920 = vmatprep.subr.mxu0 0.0
  %921 = vmatpush1.msra.mxu0 0.0
  %922 = vmatprep.subr.mxu0 0.0
  %923 = vmatpush1.msra.mxu0 0.0
  %924 = vmatprep.subr.mxu0 0.0
  %925 = vmatpush1.msra.mxu0 %v187
  %926 = vmatprep.subr.mxu0 0.0
  %927 = vmatpush1.msra.mxu0 %v186
  %928 = vmatprep.subr.mxu0 0.0
  %929 = vmatpush1.msra.mxu0 %v185
  %930 = vmatprep.subr.mxu0 0.0
  %931 = vmatpush1.msra.mxu0 %v184
  %932 = vmatprep.subr.mxu0 0.0
  %933 = vmatpush2.msra.mxu0 0.0
  %934 = vmatprep.subr.mxu0 0.0
  %935 = vmatpush2.msra.mxu0 0.0
  %936 = vmatprep.subr.mxu0 0.0
  %937 = vmatpush2.msra.mxu0 0.0
  %938 = vmatprep.subr.mxu0 0.0
  %939 = vmatpush2.msra.mxu0 0.0
  %940 = vmatprep.subr.mxu0 0.0
  %941 = vmatpush2.msra.mxu0 0.0
  %942 = vmatprep.subr.mxu0 0.0
  %943 = vmatpush2.msra.mxu0 0.0
  %944 = vmatprep.subr.mxu0 0.0
  %945 = vmatpush2.msra.mxu0 0.0
  %946 = vmatprep.subr.mxu0 0.0
  %947 = vmatpush2.msra.mxu0 0.0
  %948 = vmatprep.subr.mxu0 0.0
  %949 = vmatpush2.msra.mxu0 0.0
  %950 = vmatprep.subr.mxu0 0.0
  %951 = vmatpush2.msra.mxu0 0.0
  %952 = vmatprep.subr.mxu0 0.0
  %953 = vmatpush2.msra.mxu0 0.0
  %954 = vmatprep.subr.mxu0 0.0
  %955 = vmatpush2.msra.mxu0 0.0
  %956 = vmatprep.subr.mxu0 0.0
  %957 = vmatpush2.msra.mxu0 0.0
  %958 = vmatprep.subr.mxu0 0.0
  %959 = vmatpush2.msra.mxu0 0.0
  %960 = vmatprep.subr.mxu0 0.0
  %961 = vmatpush2.msra.mxu0 0.0
  %962 = vmatprep.subr.mxu0 0.0
  %963 = vmatpush2.msra.mxu0 0.0
  %964 = vmatprep.mubr.f32.mxu0 0.0
  %965 = vmatmul.mubr.f32.gmra.mxu0 %v898
  %v966 = vpop.f32.mrf.mxu0
  %v967 = vadd.f32 %v188, %v966
  %v968 = vpop.f32.mrf.mxu0
  %969 = vdwg.mxu0
  %v970 = vadd.f32 %v181, %v967
  %v971 = vxor.u32 %v970, 2147483648
  %v972 = vmul.f32 %v971, 1.442695
  %v973 = vpow.pop %v972
  %v974 = vadd.f32 %v973, 1.0
  %v975 = vrcp.pop %v974
  %v976 = vmul.f32 1.0, %v975
  %978 = vrot.lane.b32.xlu0 %v967, 64
  %v979 = vpop.permute.xlu0 %978
  %v981 = vmul.f32 %v976, %v979
  %983 = vrot.lane.b32.xlu0 %v981, 64
  %v984 = vpop.permute.xlu0 %983
  %v986 = vadd.f32 %v181, %v984
  %v987 = vtanh.pop %v986
  %v988 = vsub.f32 1.0, %v976
  %990 = vrot.lane.b32.xlu0 %v987, 96
  %v991 = vpop.permute.xlu0 %990
  %v993 = vmul.f32 %v988, %v991
  %v994 = vmul.f32 %v976, %v894
  %v995 = vadd.f32 %v993, %v994
  %v996 = vld [vmem:[%s1] sm:$0xff]
  %v997 = vld [vmem:[%s6] sm:$0xff]
  %v998 = vld [vmem:[%s6 + $0x8] sm:$0xff]
  %v999 = vld [vmem:[%s6 + $0x10] sm:$0xff]
  %v1000 = vld [vmem:[%s6 + $0x18] sm:$0xff]
  %v1001 = vld [vmem:[%s6 + $0x20] sm:$0xff]
  %v1002 = vld [vmem:[%s6 + $0x28] sm:$0xff]
  %v1003 = vld [vmem:[%s6 + $0x30] sm:$0xff]
  %v1004 = vld [vmem:[%s6 + $0x38] sm:$0xff]
  %v1005 = vld [vmem:[%s6 + $0x40] sm:$0xff]
  %v1006 = vld [vmem:[%s6 + $0x48] sm:$0xff]
  %v1007 = vld [vmem:[%s6 + $0x50] sm:$0xff]
  %v1008 = vld [vmem:[%s6 + $0x58] sm:$0xff]
  %v1009 = vld [vmem:[%s6 + $0x60] sm:$0xff]
  %v1010 = vld [vmem:[%s6 + $0x68] sm:$0xff]
  %v1011 = vld [vmem:[%s6 + $0x70] sm:$0xff]
  %v1012 = vld [vmem:[%s6 + $0x78] sm:$0xff]
  %v1013 = vld [vmem:[%s7] sm:$0xff]
  %1014 = vmatprep.subr.mxu0 0.0
  %1015 = vmatpush1.msra.mxu0 %v1012
  %1016 = vmatprep.subr.mxu0 0.0
  %1017 = vmatpush1.msra.mxu0 %v1011
  %1018 = vmatprep.subr.mxu0 0.0
  %1019 = vmatpush1.msra.mxu0 %v1010
  %1020 = vmatprep.subr.mxu0 0.0
  %1021 = vmatpush1.msra.mxu0 %v1009
  %1022 = vmatprep.subr.mxu0 0.0
  %1023 = vmatpush1.msra.mxu0 %v1008
  %1024 = vmatprep.subr.mxu0 0.0
  %1025 = vmatpush1.msra.mxu0 %v1007
  %1026 = vmatprep.subr.mxu0 0.0
  %1027 = vmatpush1.msra.mxu0 %v1006
  %1028 = vmatprep.subr.mxu0 0.0
  %1029 = vmatpush1.msra.mxu0 %v1005
  %1030 = vmatprep.subr.mxu0 0.0
  %1031 = vmatpush1.msra.mxu0 %v1004
  %1032 = vmatprep.subr.mxu0 0.0
  %1033 = vmatpush1.msra.mxu0 %v1003
  %1034 = vmatprep.subr.mxu0 0.0
  %1035 = vmatpush1.msra.mxu0 %v1002
  %1036 = vmatprep.subr.mxu0 0.0
  %1037 = vmatpush1.msra.mxu0 %v1001
  %1038 = vmatprep.subr.mxu0 0.0
  %1039 = vmatpush1.msra.mxu0 %v1000
  %1040 = vmatprep.subr.mxu0 0.0
  %1041 = vmatpush1.msra.mxu0 %v999
  %1042 = vmatprep.subr.mxu0 0.0
  %1043 = vmatpush1.msra.mxu0 %v998
  %1044 = vmatprep.subr.mxu0 0.0
  %1045 = vmatpush1.msra.mxu0 %v997
  %1046 = vmatprep.subr.mxu0 0.0
  %1047 = vmatpush2.msra.mxu0 0.0
  %1048 = vmatprep.subr.mxu0 0.0
  %1049 = vmatpush2.msra.mxu0 0.0
  %1050 = vmatprep.subr.mxu0 0.0
  %1051 = vmatpush2.msra.mxu0 0.0
  %1052 = vmatprep.subr.mxu0 0.0
  %1053 = vmatpush2.msra.mxu0 0.0
  %1054 = vmatprep.subr.mxu0 0.0
  %1055 = vmatpush2.msra.mxu0 0.0
  %1056 = vmatprep.subr.mxu0 0.0
  %1057 = vmatpush2.msra.mxu0 0.0
  %1058 = vmatprep.subr.mxu0 0.0
  %1059 = vmatpush2.msra.mxu0 0.0
  %1060 = vmatprep.subr.mxu0 0.0
  %1061 = vmatpush2.msra.mxu0 0.0
  %1062 = vmatprep.subr.mxu0 0.0
  %1063 = vmatpush2.msra.mxu0 0.0
  %1064 = vmatprep.subr.mxu0 0.0
  %1065 = vmatpush2.msra.mxu0 0.0
  %1066 = vmatprep.subr.mxu0 0.0
  %1067 = vmatpush2.msra.mxu0 0.0
  %1068 = vmatprep.subr.mxu0 0.0
  %1069 = vmatpush2.msra.mxu0 0.0
  %1070 = vmatprep.subr.mxu0 0.0
  %1071 = vmatpush2.msra.mxu0 0.0
  %1072 = vmatprep.subr.mxu0 0.0
  %1073 = vmatpush2.msra.mxu0 0.0
  %1074 = vmatprep.subr.mxu0 0.0
  %1075 = vmatpush2.msra.mxu0 0.0
  %1076 = vmatprep.subr.mxu0 0.0
  %1077 = vmatpush2.msra.mxu0 0.0
  %1078 = vmatprep.mubr.f32.mxu0 0.0
  %1079 = vmatmul.mubr.f32.gmra.mxu0 %v996
  %v1080 = vpop.f32.mrf.mxu0
  %v1081 = vadd.f32 %v1013, %v1080
  %v1082 = vpop.f32.mrf.mxu0
  %1083 = vdwg.mxu0
  %v1084 = vld [vmem:[%s8] sm:$0xff]
  %v1085 = vld [vmem:[%s8 + $0x8] sm:$0xff]
  %v1086 = vld [vmem:[%s8 + $0x10] sm:$0xff]
  %v1087 = vld [vmem:[%s8 + $0x18] sm:$0xff]
  %v1088 = vld [vmem:[%s8 + $0x20] sm:$0xff]
  %v1089 = vld [vmem:[%s8 + $0x28] sm:$0xff]
  %v1090 = vld [vmem:[%s8 + $0x30] sm:$0xff]
  %v1091 = vld [vmem:[%s8 + $0x38] sm:$0xff]
  %v1092 = vld [vmem:[%s8 + $0x40] sm:$0xff]
  %v1093 = vld [vmem:[%s8 + $0x48] sm:$0xff]
  %v1094 = vld [vmem:[%s8 + $0x50] sm:$0xff]
  %v1095 = vld [vmem:[%s8 + $0x58] sm:$0xff]
  %v1096 = vld [vmem:[%s9] sm:$0xff]
  %v1097 = vld [vmem:[%s9 + $0x8] sm:$0xff]
  %v1098 = vld [vmem:[%s9 + $0x10] sm:$0xff]
  %1100 = vrot.lane.b32.xlu0 %v995, 96
  %v1101 = vpop.permute.xlu0 %1100
  %v1102 = vsel %vm189, %v1101, 0
  %1104 = vmatprep.subr.mxu0 0.0
  %1105 = vmatpush1.msra.mxu0 0.0
  %1106 = vmatprep.subr.mxu0 0.0
  %1107 = vmatpush1.msra.mxu0 0.0
  %1108 = vmatprep.subr.mxu0 0.0
  %1109 = vmatpush1.msra.mxu0 0.0
  %1110 = vmatprep.subr.mxu0 0.0
  %1111 = vmatpush1.msra.mxu0 0.0
  %1112 = vmatprep.subr.mxu0 0.0
  %1113 = vmatpush1.msra.mxu0 0.0
  %1114 = vmatprep.subr.mxu0 0.0
  %1115 = vmatpush1.msra.mxu0 0.0
  %1116 = vmatprep.subr.mxu0 0.0
  %1117 = vmatpush1.msra.mxu0 0.0
  %1118 = vmatprep.subr.mxu0 0.0
  %1119 = vmatpush1.msra.mxu0 0.0
  %1120 = vmatprep.subr.mxu0 0.0
  %1121 = vmatpush1.msra.mxu0 0.0
  %1122 = vmatprep.subr.mxu0 0.0
  %1123 = vmatpush1.msra.mxu0 0.0
  %1124 = vmatprep.subr.mxu0 0.0
  %1125 = vmatpush1.msra.mxu0 0.0
  %1126 = vmatprep.subr.mxu0 0.0
  %1127 = vmatpush1.msra.mxu0 0.0
  %1128 = vmatprep.subr.mxu0 %v1094
  %1129 = vmatpush1.msra.mxu0 %v1093
  %1130 = vmatprep.subr.mxu0 %v1091
  %1131 = vmatpush1.msra.mxu0 %v1090
  %1132 = vmatprep.subr.mxu0 %v1088
  %1133 = vmatpush1.msra.mxu0 %v1087
  %1134 = vmatprep.subr.mxu0 %v1085
  %1135 = vmatpush1.msra.mxu0 %v1084
  %1136 = vmatprep.subr.mxu0 0.0
  %1137 = vmatpush2.msra.mxu0 0.0
  %1138 = vmatprep.subr.mxu0 0.0
  %1139 = vmatpush2.msra.mxu0 0.0
  %1140 = vmatprep.subr.mxu0 0.0
  %1141 = vmatpush2.msra.mxu0 0.0
  %1142 = vmatprep.subr.mxu0 0.0
  %1143 = vmatpush2.msra.mxu0 0.0
  %1144 = vmatprep.subr.mxu0 0.0
  %1145 = vmatpush2.msra.mxu0 0.0
  %1146 = vmatprep.subr.mxu0 0.0
  %1147 = vmatpush2.msra.mxu0 0.0
  %1148 = vmatprep.subr.mxu0 0.0
  %1149 = vmatpush2.msra.mxu0 0.0
  %1150 = vmatprep.subr.mxu0 0.0
  %1151 = vmatpush2.msra.mxu0 0.0
  %1152 = vmatprep.subr.mxu0 0.0
  %1153 = vmatpush2.msra.mxu0 0.0
  %1154 = vmatprep.subr.mxu0 0.0
  %1155 = vmatpush2.msra.mxu0 0.0
  %1156 = vmatprep.subr.mxu0 0.0
  %1157 = vmatpush2.msra.mxu0 0.0
  %1158 = vmatprep.subr.mxu0 0.0
  %1159 = vmatpush2.msra.mxu0 0.0
  %1160 = vmatprep.subr.mxu0 0.0
  %1161 = vmatpush2.msra.mxu0 0.0
  %1162 = vmatprep.subr.mxu0 0.0
  %1163 = vmatpush2.msra.mxu0 0.0
  %1164 = vmatprep.subr.mxu0 0.0
  %1165 = vmatpush2.msra.mxu0 0.0
  %1166 = vmatprep.subr.mxu0 0.0
  %1167 = vmatpush2.msra.mxu0 0.0
  %1168 = vmatprep.mubr.f32.mxu0 0.0
  %1169 = vmatmul.mubr.f32.gmra.mxu0 %v1102
  %v1170 = vpop.f32.mrf.mxu0
  %v1171 = vadd.f32 %v1096, %v1170
  %v1172 = vpop.f32.mrf.mxu0
  %1173 = vdwg.mxu0
  %v1174 = vadd.f32 %v1081, %v1171
  %v1175 = vxor.u32 %v1174, 2147483648
  %v1176 = vmul.f32 %v1175, 1.442695
  %v1177 = vpow.pop %v1176
  %v1178 = vadd.f32 %v1177, 1.0
  %v1179 = vrcp.pop %v1178
  %v1180 = vmul.f32 1.0, %v1179
  %1182 = vrot.lane.b32.xlu0 %v1171, 64
  %v1183 = vpop.permute.xlu0 %1182
  %v1185 = vmul.f32 %v1180, %v1183
  %1187 = vrot.lane.b32.xlu0 %v1185, 64
  %v1188 = vpop.permute.xlu0 %1187
  %v1190 = vadd.f32 %v1081, %v1188
  %v1191 = vtanh.pop %v1190
  %v1192 = vsub.f32 1.0, %v1180
  %1194 = vrot.lane.b32.xlu0 %v1191, 96
  %v1195 = vpop.permute.xlu0 %1194
  %v1197 = vmul.f32 %v1192, %v1195
  %v1198 = vmul.f32 %v1180, %v995
  %v1199 = vadd.f32 %v1197, %v1198
  %1201 = vrot.lane.b32.xlu0 %v1199, 96
  %v1202 = vpop.permute.xlu0 %1201
  %v1203 = vsel %vm189, %v1202, 0
  %1205 = vmatprep.subr.mxu0 0.0
  %1206 = vmatpush1.msra.mxu0 0.0
  %1207 = vmatprep.subr.mxu0 0.0
  %1208 = vmatpush1.msra.mxu0 0.0
  %1209 = vmatprep.subr.mxu0 0.0
  %1210 = vmatpush1.msra.mxu0 0.0
  %1211 = vmatprep.subr.mxu0 0.0
  %1212 = vmatpush1.msra.mxu0 0.0
  %1213 = vmatprep.subr.mxu0 0.0
  %1214 = vmatpush1.msra.mxu0 0.0
  %1215 = vmatprep.subr.mxu0 0.0
  %1216 = vmatpush1.msra.mxu0 0.0
  %1217 = vmatprep.subr.mxu0 0.0
  %1218 = vmatpush1.msra.mxu0 0.0
  %1219 = vmatprep.subr.mxu0 0.0
  %1220 = vmatpush1.msra.mxu0 0.0
  %1221 = vmatprep.subr.mxu0 0.0
  %1222 = vmatpush1.msra.mxu0 0.0
  %1223 = vmatprep.subr.mxu0 0.0
  %1224 = vmatpush1.msra.mxu0 0.0
  %1225 = vmatprep.subr.mxu0 0.0
  %1226 = vmatpush1.msra.mxu0 0.0
  %1227 = vmatprep.subr.mxu0 0.0
  %1228 = vmatpush1.msra.mxu0 0.0
  %1229 = vmatprep.subr.mxu0 %v1094
  %1230 = vmatpush1.msra.mxu0 %v1093
  %1231 = vmatprep.subr.mxu0 %v1091
  %1232 = vmatpush1.msra.mxu0 %v1090
  %1233 = vmatprep.subr.mxu0 %v1088
  %1234 = vmatpush1.msra.mxu0 %v1087
  %1235 = vmatprep.subr.mxu0 %v1085
  %1236 = vmatpush1.msra.mxu0 %v1084
  %1237 = vmatprep.subr.mxu0 0.0
  %1238 = vmatpush2.msra.mxu0 0.0
  %1239 = vmatprep.subr.mxu0 0.0
  %1240 = vmatpush2.msra.mxu0 0.0
  %1241 = vmatprep.subr.mxu0 0.0
  %1242 = vmatpush2.msra.mxu0 0.0
  %1243 = vmatprep.subr.mxu0 0.0
  %1244 = vmatpush2.msra.mxu0 0.0
  %1245 = vmatprep.subr.mxu0 0.0
  %1246 = vmatpush2.msra.mxu0 0.0
  %1247 = vmatprep.subr.mxu0 0.0
  %1248 = vmatpush2.msra.mxu0 0.0
  %1249 = vmatprep.subr.mxu0 0.0
  %1250 = vmatpush2.msra.mxu0 0.0
  %1251 = vmatprep.subr.mxu0 0.0
  %1252 = vmatpush2.msra.mxu0 0.0
  %1253 = vmatprep.subr.mxu0 0.0
  %1254 = vmatpush2.msra.mxu0 0.0
  %1255 = vmatprep.subr.mxu0 0.0
  %1256 = vmatpush2.msra.mxu0 0.0
  %1257 = vmatprep.subr.mxu0 0.0
  %1258 = vmatpush2.msra.mxu0 0.0
  %1259 = vmatprep.subr.mxu0 0.0
  %1260 = vmatpush2.msra.mxu0 0.0
  %1261 = vmatprep.subr.mxu0 0.0
  %1262 = vmatpush2.msra.mxu0 0.0
  %1263 = vmatprep.subr.mxu0 0.0
  %1264 = vmatpush2.msra.mxu0 0.0
  %1265 = vmatprep.subr.mxu0 0.0
  %1266 = vmatpush2.msra.mxu0 0.0
  %1267 = vmatprep.subr.mxu0 0.0
  %1268 = vmatpush2.msra.mxu0 0.0
  %1269 = vmatprep.mubr.f32.mxu0 0.0
  %1270 = vmatmul.mubr.f32.gmra.mxu0 %v1203
  %v1271 = vpop.f32.mrf.mxu0
  %v1272 = vadd.f32 %v1096, %v1271
  %v1273 = vpop.f32.mrf.mxu0
  %v1274 = vadd.f32 %v1097, %v1273
  %1275 = vdwg.mxu0
  %1276 = vmatprep.subr.mxu0 0.0
  %1277 = vmatpush1.msra.mxu0 0.0
  %1278 = vmatprep.subr.mxu0 0.0
  %1279 = vmatpush1.msra.mxu0 0.0
  %1280 = vmatprep.subr.mxu0 0.0
  %1281 = vmatpush1.msra.mxu0 0.0
  %1282 = vmatprep.subr.mxu0 0.0
  %1283 = vmatpush1.msra.mxu0 0.0
  %1284 = vmatprep.subr.mxu0 0.0
  %1285 = vmatpush1.msra.mxu0 0.0
  %1286 = vmatprep.subr.mxu0 0.0
  %1287 = vmatpush1.msra.mxu0 0.0
  %1288 = vmatprep.subr.mxu0 0.0
  %1289 = vmatpush1.msra.mxu0 0.0
  %1290 = vmatprep.subr.mxu0 0.0
  %1291 = vmatpush1.msra.mxu0 0.0
  %1292 = vmatprep.subr.mxu0 0.0
  %1293 = vmatpush1.msra.mxu0 0.0
  %1294 = vmatprep.subr.mxu0 0.0
  %1295 = vmatpush1.msra.mxu0 0.0
  %1296 = vmatprep.subr.mxu0 0.0
  %1297 = vmatpush1.msra.mxu0 0.0
  %1298 = vmatprep.subr.mxu0 0.0
  %1299 = vmatpush1.msra.mxu0 0.0
  %1300 = vmatprep.subr.mxu0 0.0
  %1301 = vmatpush1.msra.mxu0 %v1095
  %1302 = vmatprep.subr.mxu0 0.0
  %1303 = vmatpush1.msra.mxu0 %v1092
  %1304 = vmatprep.subr.mxu0 0.0
  %1305 = vmatpush1.msra.mxu0 %v1089
  %1306 = vmatprep.subr.mxu0 0.0
  %1307 = vmatpush1.msra.mxu0 %v1086
  %1308 = vmatprep.subr.mxu0 0.0
  %1309 = vmatpush2.msra.mxu0 0.0
  %1310 = vmatprep.subr.mxu0 0.0
  %1311 = vmatpush2.msra.mxu0 0.0
  %1312 = vmatprep.subr.mxu0 0.0
  %1313 = vmatpush2.msra.mxu0 0.0
  %1314 = vmatprep.subr.mxu0 0.0
  %1315 = vmatpush2.msra.mxu0 0.0
  %1316 = vmatprep.subr.mxu0 0.0
  %1317 = vmatpush2.msra.mxu0 0.0
  %1318 = vmatprep.subr.mxu0 0.0
  %1319 = vmatpush2.msra.mxu0 0.0
  %1320 = vmatprep.subr.mxu0 0.0
  %1321 = vmatpush2.msra.mxu0 0.0
  %1322 = vmatprep.subr.mxu0 0.0
  %1323 = vmatpush2.msra.mxu0 0.0
  %1324 = vmatprep.subr.mxu0 0.0
  %1325 = vmatpush2.msra.mxu0 0.0
  %1326 = vmatprep.subr.mxu0 0.0
  %1327 = vmatpush2.msra.mxu0 0.0
  %1328 = vmatprep.subr.mxu0 0.0
  %1329 = vmatpush2.msra.mxu0 0.0
  %1330 = vmatprep.subr.mxu0 0.0
  %1331 = vmatpush2.msra.mxu0 0.0
  %1332 = vmatprep.subr.mxu0 0.0
  %1333 = vmatpush2.msra.mxu0 0.0
  %1334 = vmatprep.subr.mxu0 0.0
  %1335 = vmatpush2.msra.mxu0 0.0
  %1336 = vmatprep.subr.mxu0 0.0
  %1337 = vmatpush2.msra.mxu0 0.0
  %1338 = vmatprep.subr.mxu0 0.0
  %1339 = vmatpush2.msra.mxu0 0.0
  %1340 = vmatprep.mubr.f32.mxu0 0.0
  %1341 = vmatmul.mubr.f32.gmra.mxu0 %v1203
  %v1342 = vpop.f32.mrf.mxu0
  %v1343 = vadd.f32 %v1098, %v1342
  %v1344 = vpop.f32.mrf.mxu0
  %1345 = vdwg.mxu0
  %v1346 = vadd.f32 %v1274, %v996
  %v1347 = vadd.f32 %v1081, %v1343
  %1348 = vst [vmem:[%s10] sm:$0xff] %v1346
  %v1349 = vadd.f32 %v1347, %v1272
  %v1350 = vxor.u32 %v1349, 2147483648
  %v1351 = vmul.f32 %v1350, 1.442695
  %v1352 = vpow.pop %v1351
  %v1353 = vadd.f32 %v1352, 1.0
  %v1354 = vrcp.pop %v1353
  %v1355 = vmul.f32 1.0, %v1354
  %1357 = vrot.lane.b32.xlu0 %v1272, 64
  %v1358 = vpop.permute.xlu0 %1357
  %v1360 = vmul.f32 %v1355, %v1358
  %1362 = vrot.lane.b32.xlu0 %v1360, 64
  %v1363 = vpop.permute.xlu0 %1362
  %v1365 = vadd.f32 %v1347, %v1363
  %v1366 = vtanh.pop %v1365
  %v1367 = vsub.f32 1.0, %v1355
  %1369 = vrot.lane.b32.xlu0 %v1366, 96
  %v1370 = vpop.permute.xlu0 %1369
  %v1372 = vmul.f32 %v1367, %v1370
  %v1373 = vmul.f32 %v1355, %v1199
  %v1374 = vadd.f32 %v1372, %v1373
  %v1375 = vld [vmem:[%s8] sm:$0xff]
  %v1376 = vld [vmem:[%s8 + $0x8] sm:$0xff]
  %v1377 = vld [vmem:[%s8 + $0x10] sm:$0xff]
  %v1378 = vld [vmem:[%s8 + $0x18] sm:$0xff]
  %v1379 = vld [vmem:[%s8 + $0x20] sm:$0xff]
  %v1380 = vld [vmem:[%s8 + $0x28] sm:$0xff]
  %v1381 = vld [vmem:[%s8 + $0x30] sm:$0xff]
  %v1382 = vld [vmem:[%s8 + $0x38] sm:$0xff]
  %v1383 = vld [vmem:[%s8 + $0x40] sm:$0xff]
  %v1384 = vld [vmem:[%s8 + $0x48] sm:$0xff]
  %v1385 = vld [vmem:[%s8 + $0x50] sm:$0xff]
  %v1386 = vld [vmem:[%s8 + $0x58] sm:$0xff]
  %v1387 = vld [vmem:[%s9] sm:$0xff]
  %v1388 = vld [vmem:[%s9 + $0x8] sm:$0xff]
  %v1389 = vld [vmem:[%s9 + $0x10] sm:$0xff]
  %1391 = vrot.lane.b32.xlu0 %v1374, 96
  %v1392 = vpop.permute.xlu0 %1391
  %v1393 = vsel %vm189, %v1392, 0
  %1395 = vmatprep.subr.mxu0 0.0
  %1396 = vmatpush1.msra.mxu0 0.0
  %1397 = vmatprep.subr.mxu0 0.0
  %1398 = vmatpush1.msra.mxu0 0.0
  %1399 = vmatprep.subr.mxu0 0.0
  %1400 = vmatpush1.msra.mxu0 0.0
  %1401 = vmatprep.subr.mxu0 0.0
  %1402 = vmatpush1.msra.mxu0 0.0
  %1403 = vmatprep.subr.mxu0 0.0
  %1404 = vmatpush1.msra.mxu0 0.0
  %1405 = vmatprep.subr.mxu0 0.0
  %1406 = vmatpush1.msra.mxu0 0.0
  %1407 = vmatprep.subr.mxu0 0.0
  %1408 = vmatpush1.msra.mxu0 0.0
  %1409 = vmatprep.subr.mxu0 0.0
  %1410 = vmatpush1.msra.mxu0 0.0
  %1411 = vmatprep.subr.mxu0 0.0
  %1412 = vmatpush1.msra.mxu0 0.0
  %1413 = vmatprep.subr.mxu0 0.0
  %1414 = vmatpush1.msra.mxu0 0.0
  %1415 = vmatprep.subr.mxu0 0.0
  %1416 = vmatpush1.msra.mxu0 0.0
  %1417 = vmatprep.subr.mxu0 0.0
  %1418 = vmatpush1.msra.mxu0 0.0
  %1419 = vmatprep.subr.mxu0 %v1385
  %1420 = vmatpush1.msra.mxu0 %v1384
  %1421 = vmatprep.subr.mxu0 %v1382
  %1422 = vmatpush1.msra.mxu0 %v1381
  %1423 = vmatprep.subr.mxu0 %v1379
  %1424 = vmatpush1.msra.mxu0 %v1378
  %1425 = vmatprep.subr.mxu0 %v1376
  %1426 = vmatpush1.msra.mxu0 %v1375
  %1427 = vmatprep.subr.mxu0 0.0
  %1428 = vmatpush2.msra.mxu0 0.0
  %1429 = vmatprep.subr.mxu0 0.0
  %1430 = vmatpush2.msra.mxu0 0.0
  %1431 = vmatprep.subr.mxu0 0.0
  %1432 = vmatpush2.msra.mxu0 0.0
  %1433 = vmatprep.subr.mxu0 0.0
  %1434 = vmatpush2.msra.mxu0 0.0
  %1435 = vmatprep.subr.mxu0 0.0
  %1436 = vmatpush2.msra.mxu0 0.0
  %1437 = vmatprep.subr.mxu0 0.0
  %1438 = vmatpush2.msra.mxu0 0.0
  %1439 = vmatprep.subr.mxu0 0.0
  %1440 = vmatpush2.msra.mxu0 0.0
  %1441 = vmatprep.subr.mxu0 0.0
  %1442 = vmatpush2.msra.mxu0 0.0
  %1443 = vmatprep.subr.mxu0 0.0
  %1444 = vmatpush2.msra.mxu0 0.0
  %1445 = vmatprep.subr.mxu0 0.0
  %1446 = vmatpush2.msra.mxu0 0.0
  %1447 = vmatprep.subr.mxu0 0.0
  %1448 = vmatpush2.msra.mxu0 0.0
  %1449 = vmatprep.subr.mxu0 0.0
  %1450 = vmatpush2.msra.mxu0 0.0
  %1451 = vmatprep.subr.mxu0 0.0
  %1452 = vmatpush2.msra.mxu0 0.0
  %1453 = vmatprep.subr.mxu0 0.0
  %1454 = vmatpush2.msra.mxu0 0.0
  %1455 = vmatprep.subr.mxu0 0.0
  %1456 = vmatpush2.msra.mxu0 0.0
  %1457 = vmatprep.subr.mxu0 0.0
  %1458 = vmatpush2.msra.mxu0 0.0
  %1459 = vmatprep.mubr.f32.mxu0 0.0
  %1460 = vmatmul.mubr.f32.gmra.mxu0 %v1393
  %v1461 = vpop.f32.mrf.mxu0
  %v1462 = vadd.f32 %v1387, %v1461
  %v1463 = vpop.f32.mrf.mxu0
  %v1464 = vadd.f32 %v1388, %v1463
  %1465 = vdwg.mxu0
  %1466 = vmatprep.subr.mxu0 0.0
  %1467 = vmatpush1.msra.mxu0 0.0
  %1468 = vmatprep.subr.mxu0 0.0
  %1469 = vmatpush1.msra.mxu0 0.0
  %1470 = vmatprep.subr.mxu0 0.0
  %1471 = vmatpush1.msra.mxu0 0.0
  %1472 = vmatprep.subr.mxu0 0.0
  %1473 = vmatpush1.msra.mxu0 0.0
  %1474 = vmatprep.subr.mxu0 0.0
  %1475 = vmatpush1.msra.mxu0 0.0
  %1476 = vmatprep.subr.mxu0 0.0
  %1477 = vmatpush1.msra.mxu0 0.0
  %1478 = vmatprep.subr.mxu0 0.0
  %1479 = vmatpush1.msra.mxu0 0.0
  %1480 = vmatprep.subr.mxu0 0.0
  %1481 = vmatpush1.msra.mxu0 0.0
  %1482 = vmatprep.subr.mxu0 0.0
  %1483 = vmatpush1.msra.mxu0 0.0
  %1484 = vmatprep.subr.mxu0 0.0
  %1485 = vmatpush1.msra.mxu0 0.0
  %1486 = vmatprep.subr.mxu0 0.0
  %1487 = vmatpush1.msra.mxu0 0.0
  %1488 = vmatprep.subr.mxu0 0.0
  %1489 = vmatpush1.msra.mxu0 0.0
  %1490 = vmatprep.subr.mxu0 0.0
  %1491 = vmatpush1.msra.mxu0 %v1386
  %1492 = vmatprep.subr.mxu0 0.0
  %1493 = vmatpush1.msra.mxu0 %v1383
  %1494 = vmatprep.subr.mxu0 0.0
  %1495 = vmatpush1.msra.mxu0 %v1380
  %1496 = vmatprep.subr.mxu0 0.0
  %1497 = vmatpush1.msra.mxu0 %v1377
  %1498 = vmatprep.subr.mxu0 0.0
  %1499 = vmatpush2.msra.mxu0 0.0
  %1500 = vmatprep.subr.mxu0 0.0
  %1501 = vmatpush2.msra.mxu0 0.0
  %1502 = vmatprep.subr.mxu0 0.0
  %1503 = vmatpush2.msra.mxu0 0.0
  %1504 = vmatprep.subr.mxu0 0.0
  %1505 = vmatpush2.msra.mxu0 0.0
  %1506 = vmatprep.subr.mxu0 0.0
  %1507 = vmatpush2.msra.mxu0 0.0
  %1508 = vmatprep.subr.mxu0 0.0
  %1509 = vmatpush2.msra.mxu0 0.0
  %1510 = vmatprep.subr.mxu0 0.0
  %1511 = vmatpush2.msra.mxu0 0.0
  %1512 = vmatprep.subr.mxu0 0.0
  %1513 = vmatpush2.msra.mxu0 0.0
  %1514 = vmatprep.subr.mxu0 0.0
  %1515 = vmatpush2.msra.mxu0 0.0
  %1516 = vmatprep.subr.mxu0 0.0
  %1517 = vmatpush2.msra.mxu0 0.0
  %1518 = vmatprep.subr.mxu0 0.0
  %1519 = vmatpush2.msra.mxu0 0.0
  %1520 = vmatprep.subr.mxu0 0.0
  %1521 = vmatpush2.msra.mxu0 0.0
  %1522 = vmatprep.subr.mxu0 0.0
  %1523 = vmatpush2.msra.mxu0 0.0
  %1524 = vmatprep.subr.mxu0 0.0
  %1525 = vmatpush2.msra.mxu0 0.0
  %1526 = vmatprep.subr.mxu0 0.0
  %1527 = vmatpush2.msra.mxu0 0.0
  %1528 = vmatprep.subr.mxu0 0.0
  %1529 = vmatpush2.msra.mxu0 0.0
  %1530 = vmatprep.mubr.f32.mxu0 0.0
  %1531 = vmatmul.mubr.f32.gmra.mxu0 %v1393
  %v1532 = vpop.f32.mrf.mxu0
  %v1533 = vadd.f32 %v1389, %v1532
  %v1534 = vpop.f32.mrf.mxu0
  %1535 = vdwg.mxu0
  %v1536 = vadd.f32 %v1464, %v1346
  %v1537 = vadd.f32 %v1347, %v1533
  %s1538 = scalar_lea.vmem %s10, 8
  %1539 = vst [vmem:[%s1538] sm:$0xff] %v1536
  %v1540 = vadd.f32 %v1537, %v1462
  %v1541 = vxor.u32 %v1540, 2147483648
  %v1542 = vmul.f32 %v1541, 1.442695
  %v1543 = vpow.pop %v1542
  %v1544 = vadd.f32 %v1543, 1.0
  %v1545 = vrcp.pop %v1544
  %v1546 = vmul.f32 1.0, %v1545
  %1548 = vrot.lane.b32.xlu0 %v1462, 64
  %v1549 = vpop.permute.xlu0 %1548
  %v1551 = vmul.f32 %v1546, %v1549
  %1553 = vrot.lane.b32.xlu0 %v1551, 64
  %v1554 = vpop.permute.xlu0 %1553
  %v1556 = vadd.f32 %v1537, %v1554
  %v1557 = vtanh.pop %v1556
  %v1558 = vsub.f32 1.0, %v1546
  %1560 = vrot.lane.b32.xlu0 %v1557, 96
  %v1561 = vpop.permute.xlu0 %1560
  %v1563 = vmul.f32 %v1558, %v1561
  %v1564 = vmul.f32 %v1546, %v1374
  %v1565 = vadd.f32 %v1563, %v1564
  %v1566 = vld [vmem:[%s8] sm:$0xff]
  %v1567 = vld [vmem:[%s8 + $0x8] sm:$0xff]
  %v1568 = vld [vmem:[%s8 + $0x10] sm:$0xff]
  %v1569 = vld [vmem:[%s8 + $0x18] sm:$0xff]
  %v1570 = vld [vmem:[%s8 + $0x20] sm:$0xff]
  %v1571 = vld [vmem:[%s8 + $0x28] sm:$0xff]
  %v1572 = vld [vmem:[%s8 + $0x30] sm:$0xff]
  %v1573 = vld [vmem:[%s8 + $0x38] sm:$0xff]
  %v1574 = vld [vmem:[%s8 + $0x40] sm:$0xff]
  %v1575 = vld [vmem:[%s8 + $0x48] sm:$0xff]
  %v1576 = vld [vmem:[%s8 + $0x50] sm:$0xff]
  %v1577 = vld [vmem:[%s8 + $0x58] sm:$0xff]
  %v1578 = vld [vmem:[%s9] sm:$0xff]
  %v1579 = vld [vmem:[%s9 + $0x8] sm:$0xff]
  %v1580 = vld [vmem:[%s9 + $0x10] sm:$0xff]
  %1582 = vrot.lane.b32.xlu0 %v1565, 96
  %v1583 = vpop.permute.xlu0 %1582
  %v1584 = vsel %vm189, %v1583, 0
  %1586 = vmatprep.subr.mxu0 0.0
  %1587 = vmatpush1.msra.mxu0 0.0
  %1588 = vmatprep.subr.mxu0 0.0
  %1589 = vmatpush1.msra.mxu0 0.0
  %1590 = vmatprep.subr.mxu0 0.0
  %1591 = vmatpush1.msra.mxu0 0.0
  %1592 = vmatprep.subr.mxu0 0.0
  %1593 = vmatpush1.msra.mxu0 0.0
  %1594 = vmatprep.subr.mxu0 0.0
  %1595 = vmatpush1.msra.mxu0 0.0
  %1596 = vmatprep.subr.mxu0 0.0
  %1597 = vmatpush1.msra.mxu0 0.0
  %1598 = vmatprep.subr.mxu0 0.0
  %1599 = vmatpush1.msra.mxu0 0.0
  %1600 = vmatprep.subr.mxu0 0.0
  %1601 = vmatpush1.msra.mxu0 0.0
  %1602 = vmatprep.subr.mxu0 0.0
  %1603 = vmatpush1.msra.mxu0 0.0
  %1604 = vmatprep.subr.mxu0 0.0
  %1605 = vmatpush1.msra.mxu0 0.0
  %1606 = vmatprep.subr.mxu0 0.0
  %1607 = vmatpush1.msra.mxu0 0.0
  %1608 = vmatprep.subr.mxu0 0.0
  %1609 = vmatpush1.msra.mxu0 0.0
  %1610 = vmatprep.subr.mxu0 %v1576
  %1611 = vmatpush1.msra.mxu0 %v1575
  %1612 = vmatprep.subr.mxu0 %v1573
  %1613 = vmatpush1.msra.mxu0 %v1572
  %1614 = vmatprep.subr.mxu0 %v1570
  %1615 = vmatpush1.msra.mxu0 %v1569
  %1616 = vmatprep.subr.mxu0 %v1567
  %1617 = vmatpush1.msra.mxu0 %v1566
  %1618 = vmatprep.subr.mxu0 0.0
  %1619 = vmatpush2.msra.mxu0 0.0
  %1620 = vmatprep.subr.mxu0 0.0
  %1621 = vmatpush2.msra.mxu0 0.0
  %1622 = vmatprep.subr.mxu0 0.0
  %1623 = vmatpush2.msra.mxu0 0.0
  %1624 = vmatprep.subr.mxu0 0.0
  %1625 = vmatpush2.msra.mxu0 0.0
  %1626 = vmatprep.subr.mxu0 0.0
  %1627 = vmatpush2.msra.mxu0 0.0
  %1628 = vmatprep.subr.mxu0 0.0
  %1629 = vmatpush2.msra.mxu0 0.0
  %1630 = vmatprep.subr.mxu0 0.0
  %1631 = vmatpush2.msra.mxu0 0.0
  %1632 = vmatprep.subr.mxu0 0.0
  %1633 = vmatpush2.msra.mxu0 0.0
  %1634 = vmatprep.subr.mxu0 0.0
  %1635 = vmatpush2.msra.mxu0 0.0
  %1636 = vmatprep.subr.mxu0 0.0
  %1637 = vmatpush2.msra.mxu0 0.0
  %1638 = vmatprep.subr.mxu0 0.0
  %1639 = vmatpush2.msra.mxu0 0.0
  %1640 = vmatprep.subr.mxu0 0.0
  %1641 = vmatpush2.msra.mxu0 0.0
  %1642 = vmatprep.subr.mxu0 0.0
  %1643 = vmatpush2.msra.mxu0 0.0
  %1644 = vmatprep.subr.mxu0 0.0
  %1645 = vmatpush2.msra.mxu0 0.0
  %1646 = vmatprep.subr.mxu0 0.0
  %1647 = vmatpush2.msra.mxu0 0.0
  %1648 = vmatprep.subr.mxu0 0.0
  %1649 = vmatpush2.msra.mxu0 0.0
  %1650 = vmatprep.mubr.f32.mxu0 0.0
  %1651 = vmatmul.mubr.f32.gmra.mxu0 %v1584
  %v1652 = vpop.f32.mrf.mxu0
  %v1653 = vadd.f32 %v1578, %v1652
  %v1654 = vpop.f32.mrf.mxu0
  %v1655 = vadd.f32 %v1579, %v1654
  %1656 = vdwg.mxu0
  %1657 = vmatprep.subr.mxu0 0.0
  %1658 = vmatpush1.msra.mxu0 0.0
  %1659 = vmatprep.subr.mxu0 0.0
  %1660 = vmatpush1.msra.mxu0 0.0
  %1661 = vmatprep.subr.mxu0 0.0
  %1662 = vmatpush1.msra.mxu0 0.0
  %1663 = vmatprep.subr.mxu0 0.0
  %1664 = vmatpush1.msra.mxu0 0.0
  %1665 = vmatprep.subr.mxu0 0.0
  %1666 = vmatpush1.msra.mxu0 0.0
  %1667 = vmatprep.subr.mxu0 0.0
  %1668 = vmatpush1.msra.mxu0 0.0
  %1669 = vmatprep.subr.mxu0 0.0
  %1670 = vmatpush1.msra.mxu0 0.0
  %1671 = vmatprep.subr.mxu0 0.0
  %1672 = vmatpush1.msra.mxu0 0.0
  %1673 = vmatprep.subr.mxu0 0.0
  %1674 = vmatpush1.msra.mxu0 0.0
  %1675 = vmatprep.subr.mxu0 0.0
  %1676 = vmatpush1.msra.mxu0 0.0
  %1677 = vmatprep.subr.mxu0 0.0
  %1678 = vmatpush1.msra.mxu0 0.0
  %1679 = vmatprep.subr.mxu0 0.0
  %1680 = vmatpush1.msra.mxu0 0.0
  %1681 = vmatprep.subr.mxu0 0.0
  %1682 = vmatpush1.msra.mxu0 %v1577
  %1683 = vmatprep.subr.mxu0 0.0
  %1684 = vmatpush1.msra.mxu0 %v1574
  %1685 = vmatprep.subr.mxu0 0.0
  %1686 = vmatpush1.msra.mxu0 %v1571
  %1687 = vmatprep.subr.mxu0 0.0
  %1688 = vmatpush1.msra.mxu0 %v1568
  %1689 = vmatprep.subr.mxu0 0.0
  %1690 = vmatpush2.msra.mxu0 0.0
  %1691 = vmatprep.subr.mxu0 0.0
  %1692 = vmatpush2.msra.mxu0 0.0
  %1693 = vmatprep.subr.mxu0 0.0
  %1694 = vmatpush2.msra.mxu0 0.0
  %1695 = vmatprep.subr.mxu0 0.0
  %1696 = vmatpush2.msra.mxu0 0.0
  %1697 = vmatprep.subr.mxu0 0.0
  %1698 = vmatpush2.msra.mxu0 0.0
  %1699 = vmatprep.subr.mxu0 0.0
  %1700 = vmatpush2.msra.mxu0 0.0
  %1701 = vmatprep.subr.mxu0 0.0
  %1702 = vmatpush2.msra.mxu0 0.0
  %1703 = vmatprep.subr.mxu0 0.0
  %1704 = vmatpush2.msra.mxu0 0.0
  %1705 = vmatprep.subr.mxu0 0.0
  %1706 = vmatpush2.msra.mxu0 0.0
  %1707 = vmatprep.subr.mxu0 0.0
  %1708 = vmatpush2.msra.mxu0 0.0
  %1709 = vmatprep.subr.mxu0 0.0
  %1710 = vmatpush2.msra.mxu0 0.0
  %1711 = vmatprep.subr.mxu0 0.0
  %1712 = vmatpush2.msra.mxu0 0.0
  %1713 = vmatprep.subr.mxu0 0.0
  %1714 = vmatpush2.msra.mxu0 0.0
  %1715 = vmatprep.subr.mxu0 0.0
  %1716 = vmatpush2.msra.mxu0 0.0
  %1717 = vmatprep.subr.mxu0 0.0
  %1718 = vmatpush2.msra.mxu0 0.0
  %1719 = vmatprep.subr.mxu0 0.0
  %1720 = vmatpush2.msra.mxu0 0.0
  %1721 = vmatprep.mubr.f32.mxu0 0.0
  %1722 = vmatmul.mubr.f32.gmra.mxu0 %v1584
  %v1723 = vpop.f32.mrf.mxu0
  %v1724 = vadd.f32 %v1580, %v1723
  %v1725 = vpop.f32.mrf.mxu0
  %1726 = vdwg.mxu0
  %v1727 = vadd.f32 %v1655, %v1536
  %v1728 = vadd.f32 %v1537, %v1724
  %s1729 = scalar_lea.vmem %s10, 16
  %1730 = vst [vmem:[%s1729] sm:$0xff] %v1727
  %v1731 = vadd.f32 %v1728, %v1653
  %v1732 = vxor.u32 %v1731, 2147483648
  %v1733 = vmul.f32 %v1732, 1.442695
  %v1734 = vpow.pop %v1733
  %v1735 = vadd.f32 %v1734, 1.0
  %v1736 = vrcp.pop %v1735
  %v1737 = vmul.f32 1.0, %v1736
  %1739 = vrot.lane.b32.xlu0 %v1653, 64
  %v1740 = vpop.permute.xlu0 %1739
  %v1742 = vmul.f32 %v1737, %v1740
  %1744 = vrot.lane.b32.xlu0 %v1742, 64
  %v1745 = vpop.permute.xlu0 %1744
  %v1747 = vadd.f32 %v1728, %v1745
  %v1748 = vtanh.pop %v1747
  %v1749 = vsub.f32 1.0, %v1737
  %1751 = vrot.lane.b32.xlu0 %v1748, 96
  %v1752 = vpop.permute.xlu0 %1751
  %v1754 = vmul.f32 %v1749, %v1752
  %v1755 = vmul.f32 %v1737, %v1565
  %v1756 = vadd.f32 %v1754, %v1755
  %v1757 = vld [vmem:[%s8] sm:$0xff]
  %v1758 = vld [vmem:[%s8 + $0x8] sm:$0xff]
  %v1759 = vld [vmem:[%s8 + $0x10] sm:$0xff]
  %v1760 = vld [vmem:[%s8 + $0x18] sm:$0xff]
  %v1761 = vld [vmem:[%s8 + $0x20] sm:$0xff]
  %v1762 = vld [vmem:[%s8 + $0x28] sm:$0xff]
  %v1763 = vld [vmem:[%s8 + $0x30] sm:$0xff]
  %v1764 = vld [vmem:[%s8 + $0x38] sm:$0xff]
  %v1765 = vld [vmem:[%s8 + $0x40] sm:$0xff]
  %v1766 = vld [vmem:[%s8 + $0x48] sm:$0xff]
  %v1767 = vld [vmem:[%s8 + $0x50] sm:$0xff]
  %v1768 = vld [vmem:[%s8 + $0x58] sm:$0xff]
  %v1769 = vld [vmem:[%s9] sm:$0xff]
  %v1770 = vld [vmem:[%s9 + $0x8] sm:$0xff]
  %v1771 = vld [vmem:[%s9 + $0x10] sm:$0xff]
  %1773 = vrot.lane.b32.xlu0 %v1756, 96
  %v1774 = vpop.permute.xlu0 %1773
  %v1775 = vsel %vm189, %v1774, 0
  %1777 = vmatprep.subr.mxu0 0.0
  %1778 = vmatpush1.msra.mxu0 0.0
  %1779 = vmatprep.subr.mxu0 0.0
  %1780 = vmatpush1.msra.mxu0 0.0
  %1781 = vmatprep.subr.mxu0 0.0
  %1782 = vmatpush1.msra.mxu0 0.0
  %1783 = vmatprep.subr.mxu0 0.0
  %1784 = vmatpush1.msra.mxu0 0.0
  %1785 = vmatprep.subr.mxu0 0.0
  %1786 = vmatpush1.msra.mxu0 0.0
  %1787 = vmatprep.subr.mxu0 0.0
  %1788 = vmatpush1.msra.mxu0 0.0
  %1789 = vmatprep.subr.mxu0 0.0
  %1790 = vmatpush1.msra.mxu0 0.0
  %1791 = vmatprep.subr.mxu0 0.0
  %1792 = vmatpush1.msra.mxu0 0.0
  %1793 = vmatprep.subr.mxu0 0.0
  %1794 = vmatpush1.msra.mxu0 0.0
  %1795 = vmatprep.subr.mxu0 0.0
  %1796 = vmatpush1.msra.mxu0 0.0
  %1797 = vmatprep.subr.mxu0 0.0
  %1798 = vmatpush1.msra.mxu0 0.0
  %1799 = vmatprep.subr.mxu0 0.0
  %1800 = vmatpush1.msra.mxu0 0.0
  %1801 = vmatprep.subr.mxu0 %v1767
  %1802 = vmatpush1.msra.mxu0 %v1766
  %1803 = vmatprep.subr.mxu0 %v1764
  %1804 = vmatpush1.msra.mxu0 %v1763
  %1805 = vmatprep.subr.mxu0 %v1761
  %1806 = vmatpush1.msra.mxu0 %v1760
  %1807 = vmatprep.subr.mxu0 %v1758
  %1808 = vmatpush1.msra.mxu0 %v1757
  %1809 = vmatprep.subr.mxu0 0.0
  %1810 = vmatpush2.msra.mxu0 0.0
  %1811 = vmatprep.subr.mxu0 0.0
  %1812 = vmatpush2.msra.mxu0 0.0
  %1813 = vmatprep.subr.mxu0 0.0
  %1814 = vmatpush2.msra.mxu0 0.0
  %1815 = vmatprep.subr.mxu0 0.0
  %1816 = vmatpush2.msra.mxu0 0.0
  %1817 = vmatprep.subr.mxu0 0.0
  %1818 = vmatpush2.msra.mxu0 0.0
  %1819 = vmatprep.subr.mxu0 0.0
  %1820 = vmatpush2.msra.mxu0 0.0
  %1821 = vmatprep.subr.mxu0 0.0
  %1822 = vmatpush2.msra.mxu0 0.0
  %1823 = vmatprep.subr.mxu0 0.0
  %1824 = vmatpush2.msra.mxu0 0.0
  %1825 = vmatprep.subr.mxu0 0.0
  %1826 = vmatpush2.msra.mxu0 0.0
  %1827 = vmatprep.subr.mxu0 0.0
  %1828 = vmatpush2.msra.mxu0 0.0
  %1829 = vmatprep.subr.mxu0 0.0
  %1830 = vmatpush2.msra.mxu0 0.0
  %1831 = vmatprep.subr.mxu0 0.0
  %1832 = vmatpush2.msra.mxu0 0.0
  %1833 = vmatprep.subr.mxu0 0.0
  %1834 = vmatpush2.msra.mxu0 0.0
  %1835 = vmatprep.subr.mxu0 0.0
  %1836 = vmatpush2.msra.mxu0 0.0
  %1837 = vmatprep.subr.mxu0 0.0
  %1838 = vmatpush2.msra.mxu0 0.0
  %1839 = vmatprep.subr.mxu0 0.0
  %1840 = vmatpush2.msra.mxu0 0.0
  %1841 = vmatprep.mubr.f32.mxu0 0.0
  %1842 = vmatmul.mubr.f32.gmra.mxu0 %v1775
  %v1843 = vpop.f32.mrf.mxu0
  %v1844 = vadd.f32 %v1769, %v1843
  %v1845 = vpop.f32.mrf.mxu0
  %v1846 = vadd.f32 %v1770, %v1845
  %1847 = vdwg.mxu0
  %1848 = vmatprep.subr.mxu0 0.0
  %1849 = vmatpush1.msra.mxu0 0.0
  %1850 = vmatprep.subr.mxu0 0.0
  %1851 = vmatpush1.msra.mxu0 0.0
  %1852 = vmatprep.subr.mxu0 0.0
  %1853 = vmatpush1.msra.mxu0 0.0
  %1854 = vmatprep.subr.mxu0 0.0
  %1855 = vmatpush1.msra.mxu0 0.0
  %1856 = vmatprep.subr.mxu0 0.0
  %1857 = vmatpush1.msra.mxu0 0.0
  %1858 = vmatprep.subr.mxu0 0.0
  %1859 = vmatpush1.msra.mxu0 0.0
  %1860 = vmatprep.subr.mxu0 0.0
  %1861 = vmatpush1.msra.mxu0 0.0
  %1862 = vmatprep.subr.mxu0 0.0
  %1863 = vmatpush1.msra.mxu0 0.0
  %1864 = vmatprep.subr.mxu0 0.0
  %1865 = vmatpush1.msra.mxu0 0.0
  %1866 = vmatprep.subr.mxu0 0.0
  %1867 = vmatpush1.msra.mxu0 0.0
  %1868 = vmatprep.subr.mxu0 0.0
  %1869 = vmatpush1.msra.mxu0 0.0
  %1870 = vmatprep.subr.mxu0 0.0
  %1871 = vmatpush1.msra.mxu0 0.0
  %1872 = vmatprep.subr.mxu0 0.0
  %1873 = vmatpush1.msra.mxu0 %v1768
  %1874 = vmatprep.subr.mxu0 0.0
  %1875 = vmatpush1.msra.mxu0 %v1765
  %1876 = vmatprep.subr.mxu0 0.0
  %1877 = vmatpush1.msra.mxu0 %v1762
  %1878 = vmatprep.subr.mxu0 0.0
  %1879 = vmatpush1.msra.mxu0 %v1759
  %1880 = vmatprep.subr.mxu0 0.0
  %1881 = vmatpush2.msra.mxu0 0.0
  %1882 = vmatprep.subr.mxu0 0.0
  %1883 = vmatpush2.msra.mxu0 0.0
  %1884 = vmatprep.subr.mxu0 0.0
  %1885 = vmatpush2.msra.mxu0 0.0
  %1886 = vmatprep.subr.mxu0 0.0
  %1887 = vmatpush2.msra.mxu0 0.0
  %1888 = vmatprep.subr.mxu0 0.0
  %1889 = vmatpush2.msra.mxu0 0.0
  %1890 = vmatprep.subr.mxu0 0.0
  %1891 = vmatpush2.msra.mxu0 0.0
  %1892 = vmatprep.subr.mxu0 0.0
  %1893 = vmatpush2.msra.mxu0 0.0
  %1894 = vmatprep.subr.mxu0 0.0
  %1895 = vmatpush2.msra.mxu0 0.0
  %1896 = vmatprep.subr.mxu0 0.0
  %1897 = vmatpush2.msra.mxu0 0.0
  %1898 = vmatprep.subr.mxu0 0.0
  %1899 = vmatpush2.msra.mxu0 0.0
  %1900 = vmatprep.subr.mxu0 0.0
  %1901 = vmatpush2.msra.mxu0 0.0
  %1902 = vmatprep.subr.mxu0 0.0
  %1903 = vmatpush2.msra.mxu0 0.0
  %1904 = vmatprep.subr.mxu0 0.0
  %1905 = vmatpush2.msra.mxu0 0.0
  %1906 = vmatprep.subr.mxu0 0.0
  %1907 = vmatpush2.msra.mxu0 0.0
  %1908 = vmatprep.subr.mxu0 0.0
  %1909 = vmatpush2.msra.mxu0 0.0
  %1910 = vmatprep.subr.mxu0 0.0
  %1911 = vmatpush2.msra.mxu0 0.0
  %1912 = vmatprep.mubr.f32.mxu0 0.0
  %1913 = vmatmul.mubr.f32.gmra.mxu0 %v1775
  %v1914 = vpop.f32.mrf.mxu0
  %v1915 = vadd.f32 %v1771, %v1914
  %v1916 = vpop.f32.mrf.mxu0
  %1917 = vdwg.mxu0
  %v1918 = vadd.f32 %v1846, %v1727
  %v1919 = vadd.f32 %v1728, %v1915
  %s1920 = scalar_lea.vmem %s10, 24
  %1921 = vst [vmem:[%s1920] sm:$0xff] %v1918
  %v1922 = vadd.f32 %v1919, %v1844
  %v1923 = vxor.u32 %v1922, 2147483648
  %v1924 = vmul.f32 %v1923, 1.442695
  %v1925 = vpow.pop %v1924
  %v1926 = vadd.f32 %v1925, 1.0
  %v1927 = vrcp.pop %v1926
  %v1928 = vmul.f32 1.0, %v1927
  %1930 = vrot.lane.b32.xlu0 %v1844, 64
  %v1931 = vpop.permute.xlu0 %1930
  %v1933 = vmul.f32 %v1928, %v1931
  %1935 = vrot.lane.b32.xlu0 %v1933, 64
  %v1936 = vpop.permute.xlu0 %1935
  %v1938 = vadd.f32 %v1919, %v1936
  %v1939 = vtanh.pop %v1938
  %v1940 = vsub.f32 1.0, %v1928
  %1942 = vrot.lane.b32.xlu0 %v1939, 96
  %v1943 = vpop.permute.xlu0 %1942
  %v1945 = vmul.f32 %v1940, %v1943
  %v1946 = vmul.f32 %v1928, %v1756
  %v1947 = vadd.f32 %v1945, %v1946
  %1949 = vrot.lane.b32.xlu0 %v1947, 96
  %v1950 = vpop.permute.xlu0 %1949
  %1952 = vst.msk [vmem:[%s11] sm:$0xff] %vm189, %v1950
  %v1953 = vld [vmem:[%s8] sm:$0xff]
  %v1954 = vld [vmem:[%s8 + $0x8] sm:$0xff]
  %v1955 = vld [vmem:[%s8 + $0x18] sm:$0xff]
  %v1956 = vld [vmem:[%s8 + $0x20] sm:$0xff]
  %v1957 = vld [vmem:[%s8 + $0x30] sm:$0xff]
  %v1958 = vld [vmem:[%s8 + $0x38] sm:$0xff]
  %v1959 = vld [vmem:[%s8 + $0x48] sm:$0xff]
  %v1960 = vld [vmem:[%s8 + $0x50] sm:$0xff]
  %v1961 = vld [vmem:[%s9 + $0x8] sm:$0xff]
  %v1962 = vsel %vm189, %v1950, 0
  %1964 = vmatprep.subr.mxu0 0.0
  %1965 = vmatpush1.msra.mxu0 0.0
  %1966 = vmatprep.subr.mxu0 0.0
  %1967 = vmatpush1.msra.mxu0 0.0
  %1968 = vmatprep.subr.mxu0 0.0
  %1969 = vmatpush1.msra.mxu0 0.0
  %1970 = vmatprep.subr.mxu0 0.0
  %1971 = vmatpush1.msra.mxu0 0.0
  %1972 = vmatprep.subr.mxu0 0.0
  %1973 = vmatpush1.msra.mxu0 0.0
  %1974 = vmatprep.subr.mxu0 0.0
  %1975 = vmatpush1.msra.mxu0 0.0
  %1976 = vmatprep.subr.mxu0 0.0
  %1977 = vmatpush1.msra.mxu0 0.0
  %1978 = vmatprep.subr.mxu0 0.0
  %1979 = vmatpush1.msra.mxu0 0.0
  %1980 = vmatprep.subr.mxu0 0.0
  %1981 = vmatpush1.msra.mxu0 0.0
  %1982 = vmatprep.subr.mxu0 0.0
  %1983 = vmatpush1.msra.mxu0 0.0
  %1984 = vmatprep.subr.mxu0 0.0
  %1985 = vmatpush1.msra.mxu0 0.0
  %1986 = vmatprep.subr.mxu0 0.0
  %1987 = vmatpush1.msra.mxu0 0.0
  %1988 = vmatprep.subr.mxu0 %v1960
  %1989 = vmatpush1.msra.mxu0 %v1959
  %1990 = vmatprep.subr.mxu0 %v1958
  %1991 = vmatpush1.msra.mxu0 %v1957
  %1992 = vmatprep.subr.mxu0 %v1956
  %1993 = vmatpush1.msra.mxu0 %v1955
  %1994 = vmatprep.subr.mxu0 %v1954
  %1995 = vmatpush1.msra.mxu0 %v1953
  %1996 = vmatprep.subr.mxu0 0.0
  %1997 = vmatpush2.msra.mxu0 0.0
  %1998 = vmatprep.subr.mxu0 0.0
  %1999 = vmatpush2.msra.mxu0 0.0
  %2000 = vmatprep.subr.mxu0 0.0
  %2001 = vmatpush2.msra.mxu0 0.0
  %2002 = vmatprep.subr.mxu0 0.0
  %2003 = vmatpush2.msra.mxu0 0.0
  %2004 = vmatprep.subr.mxu0 0.0
  %2005 = vmatpush2.msra.mxu0 0.0
  %2006 = vmatprep.subr.mxu0 0.0
  %2007 = vmatpush2.msra.mxu0 0.0
  %2008 = vmatprep.subr.mxu0 0.0
  %2009 = vmatpush2.msra.mxu0 0.0
  %2010 = vmatprep.subr.mxu0 0.0
  %2011 = vmatpush2.msra.mxu0 0.0
  %2012 = vmatprep.subr.mxu0 0.0
  %2013 = vmatpush2.msra.mxu0 0.0
  %2014 = vmatprep.subr.mxu0 0.0
  %2015 = vmatpush2.msra.mxu0 0.0
  %2016 = vmatprep.subr.mxu0 0.0
  %2017 = vmatpush2.msra.mxu0 0.0
  %2018 = vmatprep.subr.mxu0 0.0
  %2019 = vmatpush2.msra.mxu0 0.0
  %2020 = vmatprep.subr.mxu0 0.0
  %2021 = vmatpush2.msra.mxu0 0.0
  %2022 = vmatprep.subr.mxu0 0.0
  %2023 = vmatpush2.msra.mxu0 0.0
  %2024 = vmatprep.subr.mxu0 0.0
  %2025 = vmatpush2.msra.mxu0 0.0
  %2026 = vmatprep.subr.mxu0 0.0
  %2027 = vmatpush2.msra.mxu0 0.0
  %2028 = vmatprep.mubr.f32.mxu0 0.0
  %2029 = vmatmul.mubr.f32.gmra.mxu0 %v1962
  %v2030 = vpop.f32.mrf.mxu0
  %v2031 = vpop.f32.mrf.mxu0
  %v2032 = vadd.f32 %v1961, %v2031
  %2033 = vdwg.mxu0
  %v2034 = vadd.f32 %v2032, %v1918
  %s2035 = scalar_lea.vmem %s10, 32
  %2036 = vst [vmem:[%s2035] sm:$0xff] %v2034
  // Predicated region
  $region42: #{seq2seq_forward.1} parent=0 // pred_check
    _
  $region43: #{seq2seq_forward.1} parent=0 // pred_check_branch
    %2038 = sbr.rel (0) target = $region45
  $region44: #{seq2seq_forward.1} parent=0 // pred_region
    _
  $region45: #{seq2seq_forward.1} parent=0 // pred_fallthru
    _
  // Predicated region
  $region46: #{seq2seq_forward.1} parent=0 // pred_check
    _
  $region47: #{seq2seq_forward.1} parent=0 // pred_check_branch
    %2040 = sbr.rel (0) target = $region49
  $region48: #{seq2seq_forward.1} parent=0 // pred_region
    _
  $region49: #{seq2seq_forward.1} parent=0 // pred_fallthru
    _
  // Predicated region
  $region50: #{seq2seq_forward.1} parent=0 // pred_check
    _
  $region51: #{seq2seq_forward.1} parent=0 // pred_check_branch
    %2042 = sbr.rel (0) target = $region53
  $region52: #{seq2seq_forward.1} parent=0 // pred_region
    _
  $region53: #{seq2seq_forward.1} parent=0 // pred_fallthru
    _
  // Predicated region
  $region54: #{seq2seq_forward.1} parent=0 // pred_check
    _
  $region55: #{seq2seq_forward.1} parent=0 // pred_check_branch
    %2044 = sbr.rel (0) target = $region57
  $region56: #{seq2seq_forward.1} parent=0 // pred_region
    _
  $region57: #{seq2seq_forward.1} parent=0 // pred_fallthru
    _

</llo_original>
